<compile_context>
chip_gen: v5e
topology: v5e:2x2
jax: 0.10.0
libtpu: 0.0.40
codegen_flags: <defaults>
</compile_context>

<pallas_src>
import jax
import jax.numpy as jnp
from jax.experimental import pallas as pl
from jax.experimental.pallas import tpu as pltpu


# ------------------------------ helpers -------------------------------------
def _round_up(x, m):
    return ((x + m - 1) // m) * m


def _pad_cols(w, cols_p):
    if w.shape[1] == cols_p:
        return w
    return jnp.zeros((w.shape[0], cols_p), w.dtype).at[:, :w.shape[1]].set(w)


def _full_spec(shape):
    nd = len(shape)
    return pl.BlockSpec(tuple(shape), lambda *_: (0,) * nd)


# --------------------------- fused GRUNet kernel -----------------------------
def _make_grunet_kernel(n_layers, T, Bp, H, Gp):
    def kernel(*refs):
        n_in = 3 + 4 * n_layers + 2
        x_ref, h0_ref, len_ref = refs[0], refs[1], refs[2]
        w_refs = refs[3:3 + 4 * n_layers]
        fcw_ref = refs[3 + 4 * n_layers]
        fcb_ref = refs[4 + 4 * n_layers]
        y_ref = refs[n_in]
        hfin_ref = refs[n_in + 1]
        act_scr = refs[n_in + 2]    # (T*Bp, H)  inter-layer activations
        gi_scr = refs[n_in + 3]     # (T*Bp, Gp) hoisted input projection

        lens = len_ref[...]         # (Bp, 1) int32 — hoisted out of all loops

        for l in range(n_layers):
            wih_ref, whh_ref, bih_ref, bhh_ref = w_refs[4 * l:4 * l + 4]

            # ---- hoisted input projection: one big bf16 MXU matmul over T ---
            xin = x_ref[...] if l == 0 else act_scr[...]
            gi_scr[...] = (jnp.dot(xin.astype(jnp.bfloat16), wih_ref[...],
                                   preferred_element_type=jnp.float32)
                           + bih_ref[...])

            whh = whh_ref[...]      # (H, Gp) bf16, held across the time loop
            bhh = bhh_ref[...]      # (1, Gp) f32

            # ---- serial time recurrence, h carried in vregs -----------------
            def time_step(t, h_prev):
                base = pl.multiple_of(t * Bp, Bp)
                gi_t = gi_scr[pl.ds(base, Bp), :]
                gh = jnp.dot(h_prev.astype(jnp.bfloat16), whh,
                             preferred_element_type=jnp.float32) + bhh
                r = jax.nn.sigmoid(gi_t[:, 0:H] + gh[:, 0:H])
                z = jax.nn.sigmoid(gi_t[:, H:2 * H] + gh[:, H:2 * H])
                n = jnp.tanh(gi_t[:, 2 * H:3 * H] + r * gh[:, 2 * H:3 * H])
                h_new = n + z * (h_prev - n)          # == (1-z)*n + z*h_prev
                m = (lens > t).astype(jnp.float32)    # (Bp, 1) in-kernel mask
                # pad_packed_sequence gives zeros past each sequence's length
                act_scr[pl.ds(base, Bp), :] = m * h_new
                return h_prev + m * (h_new - h_prev)

            h_fin = jax.lax.fori_loop(0, T, time_step, h0_ref[l],
                                      unroll=min(T, 8))
            hfin_ref[l] = h_fin

        # ---- fused FC head on the last layer's activations ------------------
        y_ref[...] = (jnp.dot(act_scr[...].astype(jnp.bfloat16), fcw_ref[...],
                              preferred_element_type=jnp.float32)
                      + fcb_ref[...]).astype(y_ref.dtype)

    return kernel


def grunet_forward(x2d, h0p, lens_col, layers_p, fcw_p, fcb_p,
                   n_layers, T, Bp, H, Gp, O):
    flat_w = []
    for (wih, whh, bih, bhh) in layers_p:
        flat_w += [wih, whh, bih, bhh]
    inputs = [x2d, h0p, lens_col] + flat_w + [fcw_p, fcb_p]

    out_shapes = (jax.ShapeDtypeStruct((T * Bp, O), jnp.float32),
                  jax.ShapeDtypeStruct((n_layers, Bp, H), jnp.float32))

    y2d, hfin = pl.pallas_call(
        _make_grunet_kernel(n_layers, T, Bp, H, Gp),
        out_shape=out_shapes,
        grid_spec=pltpu.PrefetchScalarGridSpec(
            num_scalar_prefetch=0,
            grid=(1,),
            in_specs=[_full_spec(a.shape) for a in inputs],
            out_specs=(_full_spec((T * Bp, O)),
                       _full_spec((n_layers, Bp, H))),
            scratch_shapes=[pltpu.VMEM((T * Bp, H), jnp.float32),
                            pltpu.VMEM((T * Bp, Gp), jnp.float32)]),
        compiler_params=pltpu.CompilerParams(
            dimension_semantics=("arbitrary",)),
    )(*inputs)
    return y2d, hfin


# ------------------------------ GRUNet wrapper -------------------------------
class GRUNetPallas:
    def __init__(self, input_dims, hidden_dims, output_dims, n_layers, key):
        self.input_dims = input_dims
        self.hidden_dims = hidden_dims
        self.output_dims = output_dims
        self.n_layers = n_layers

        H = hidden_dims
        self.Gp = _round_up(3 * H, 128)   # packed (r,z,n) padded to 128 lanes
        Gp = self.Gp

        scale = 1.0 / jnp.sqrt(jnp.float32(H))
        keys = jax.random.split(key, 4 * n_layers + 2)

        self.layers = []    # unpadded f32 (reference / source of truth)
        self.layers_p = []  # gate-packed, col-padded, bf16 weights for kernel
        ki = 0
        for l in range(n_layers):
            d_in = input_dims if l == 0 else hidden_dims
            w_ih = jax.random.uniform(keys[ki], (d_in, 3 * H), jnp.float32,
                                      -scale, scale); ki += 1
            w_hh = jax.random.uniform(keys[ki], (H, 3 * H), jnp.float32,
                                      -scale, scale); ki += 1
            b_ih = jax.random.uniform(keys[ki], (1, 3 * H), jnp.float32,
                                      -scale, scale); ki += 1
            b_hh = jax.random.uniform(keys[ki], (1, 3 * H), jnp.float32,
                                      -scale, scale); ki += 1
            self.layers.append((w_ih, w_hh, b_ih, b_hh))
            self.layers_p.append((
                _pad_cols(w_ih, Gp).astype(jnp.bfloat16),
                _pad_cols(w_hh, Gp).astype(jnp.bfloat16),
                _pad_cols(b_ih, Gp),                    # biases stay f32
                _pad_cols(b_hh, Gp),
            ))
        self.fc_w = jax.random.uniform(keys[ki], (H, output_dims), jnp.float32,
                                       -scale, scale); ki += 1
        self.fc_b = jax.random.uniform(keys[ki], (1, output_dims), jnp.float32,
                                       -scale, scale)
        self.fc_w_p = self.fc_w.astype(jnp.bfloat16)
        self.fc_b_p = self.fc_b

    def init_hidden(self, batch_size):
        return jnp.zeros((self.n_layers, batch_size, self.hidden_dims),
                         jnp.float32)

    def __call__(self, seqs, h=None):
        # seqs: list of arrays [L_i, input_dims]  (== pack_sequence input)
        lengths = [int(s.shape[0]) for s in seqs]
        B = len(seqs)
        T = max(lengths)
        Bp = _round_up(B, 8)
        H, D, O = self.hidden_dims, self.input_dims, self.output_dims

        # padded input [T*Bp, D]
        x = jnp.zeros((T, Bp, D), jnp.float32)
        for i, s in enumerate(seqs):
            x = x.at[:s.shape[0], i, :].set(s.astype(jnp.float32))
        x2d = x.reshape(T * Bp, D)

        # tiny per-sequence length column (padded batch rows have length 0)
        lens_col = jnp.zeros((Bp, 1), jnp.int32).at[:B, 0].set(
            jnp.asarray(lengths, jnp.int32))

        # padded initial hidden state
        h0p = jnp.zeros((self.n_layers, Bp, H), jnp.float32)
        if h is not None:
            h0p = h0p.at[:, :B, :].set(h.astype(jnp.float32))

        y2d, hfin = grunet_forward(x2d, h0p, lens_col, self.layers_p,
                                   self.fc_w_p, self.fc_b_p,
                                   self.n_layers, T, Bp, H, self.Gp, O)

        out_padded = y2d.reshape(T, Bp, O)
        out = [out_padded[:lengths[i], i, :] for i in range(B)]
        h_out = hfin[:, :B, :]
        return out, h_out


# ------------------------- pure-JAX reference check --------------------------
# Mirrors the kernel's numerics (bf16 matmul operands, f32 accumulation and
# f32 gate math) so the tolerance check is tight and robust.
def _ref_gru_layer(x, h0, w_ih, w_hh, b_ih, b_hh, lengths):
    T, B, _ = x.shape
    H = h0.shape[1]
    w_ih_bf = w_ih.astype(jnp.bfloat16)
    w_hh_bf = w_hh.astype(jnp.bfloat16)

    def step(h_prev, inp):
        x_t, t = inp
        gi = jnp.dot(x_t.astype(jnp.bfloat16), w_ih_bf,
                     preferred_element_type=jnp.float32) + b_ih
        gh = jnp.dot(h_prev.astype(jnp.bfloat16), w_hh_bf,
                     preferred_element_type=jnp.float32) + b_hh
        r = jax.nn.sigmoid(gi[:, :H] + gh[:, :H])
        z = jax.nn.sigmoid(gi[:, H:2 * H] + gh[:, H:2 * H])
        n = jnp.tanh(gi[:, 2 * H:] + r * gh[:, 2 * H:])
        h_new = (1.0 - z) * n + z * h_prev
        mask = (t < lengths.reshape(B, 1)).astype(jnp.float32)
        h_upd = mask * h_new + (1.0 - mask) * h_prev
        return h_upd, mask * h_new

    h_fin, ys = jax.lax.scan(step, h0, (x, jnp.arange(T)))
    return ys, h_fin


def _ref_forward(net, seqs, h=None):
    lengths = [int(s.shape[0]) for s in seqs]
    B, T = len(seqs), max(lengths)
    x = jnp.zeros((T, B, net.input_dims), jnp.float32)
    for i, s in enumerate(seqs):
        x = x.at[:s.shape[0], i, :].set(s.astype(jnp.float32))
    if h is None:
        h = net.init_hidden(B)
    lens = jnp.asarray(lengths, jnp.int32)
    layer_in = x
    h_outs = []
    for l in range(net.n_layers):
        w_ih, w_hh, b_ih, b_hh = net.layers[l]
        layer_in, h_l = _ref_gru_layer(layer_in, h[l], w_ih, w_hh, b_ih, b_hh,
                                       lens)
        h_outs.append(h_l)
    out_padded = jnp.dot(layer_in.astype(jnp.bfloat16),
                         net.fc_w.astype(jnp.bfloat16),
                         preferred_element_type=jnp.float32) + net.fc_b
    out = [out_padded[:lengths[i], i, :] for i in range(B)]
    return out, jnp.stack(h_outs, 0)


# ----------------------------------- main ------------------------------------
if __name__ == "__main__":
    input_dims, hidden_dims, output_dims, n_layers = 8, 32, 16, 2
    key = jax.random.PRNGKey(0)
    k_net, k_s0, k_s1, k_s2 = jax.random.split(key, 4)

    net = GRUNetPallas(input_dims, hidden_dims, output_dims, n_layers, k_net)

    # variable-length sequences (what pack_sequence would take)
    seqs = [
        jax.random.normal(k_s0, (8, input_dims), jnp.float32),
        jax.random.normal(k_s1, (5, input_dims), jnp.float32),
        jax.random.normal(k_s2, (7, input_dims), jnp.float32),
    ]

    out, h = net(seqs)
    jax.block_until_ready(h)
    for o in out:
        jax.block_until_ready(o)

    # validate against the pure-JAX reference (same bf16-operand numerics)
    ref_out, ref_h = _ref_forward(net, seqs)
    assert h.shape == ref_h.shape
    assert jnp.allclose(h, ref_h, atol=2e-2, rtol=2e-2)
    for o, ro in zip(out, ref_out):
        assert o.shape == ro.shape
        assert jnp.allclose(o, ro, atol=2e-2, rtol=2e-2)

    print("KERNEL_OK")
</pallas_src>

<mosaic_0001>
module attributes {stable_mosaic.version = 11 : i64} {
  func.func @kernel(%arg0: i32, %arg1: memref<64x8xf32, #tpu.memory_space<vmem>>, %arg2: memref<2x8x32xf32, #tpu.memory_space<vmem>>, %arg3: memref<8x1xi32, #tpu.memory_space<vmem>>, %arg4: memref<8x128xbf16, #tpu.memory_space<vmem>>, %arg5: memref<32x128xbf16, #tpu.memory_space<vmem>>, %arg6: memref<1x128xf32, #tpu.memory_space<vmem>>, %arg7: memref<1x128xf32, #tpu.memory_space<vmem>>, %arg8: memref<32x128xbf16, #tpu.memory_space<vmem>>, %arg9: memref<32x128xbf16, #tpu.memory_space<vmem>>, %arg10: memref<1x128xf32, #tpu.memory_space<vmem>>, %arg11: memref<1x128xf32, #tpu.memory_space<vmem>>, %arg12: memref<32x16xbf16, #tpu.memory_space<vmem>>, %arg13: memref<1x16xf32, #tpu.memory_space<vmem>>, %arg14: memref<64x16xf32, #tpu.memory_space<vmem>>, %arg15: memref<2x8x32xf32, #tpu.memory_space<vmem>>, %arg16: memref<64x32xf32, #tpu.memory_space<vmem>>, %arg17: memref<64x128xf32, #tpu.memory_space<vmem>>) attributes {dimension_semantics = [#tpu.dimension_semantics<arbitrary>], iteration_bounds = array<i64: 1>, scalar_prefetch = 0 : i64, scratch_operands = 2 : i64, tpu.core_type = #tpu.core_type<tc>, window_params = [{pipeline_mode = #tpu.pipeline_mode<synchronous>, transform_indices = @transform_0, window_bounds = array<i64: 64, 8>}, {pipeline_mode = #tpu.pipeline_mode<synchronous>, transform_indices = @transform_1, window_bounds = array<i64: 2, 8, 32>}, {pipeline_mode = #tpu.pipeline_mode<synchronous>, transform_indices = @transform_2, window_bounds = array<i64: 8, 1>}, {pipeline_mode = #tpu.pipeline_mode<synchronous>, transform_indices = @transform_3, window_bounds = array<i64: 8, 128>}, {pipeline_mode = #tpu.pipeline_mode<synchronous>, transform_indices = @transform_4, window_bounds = array<i64: 32, 128>}, {pipeline_mode = #tpu.pipeline_mode<synchronous>, transform_indices = @transform_5, window_bounds = array<i64: 1, 128>}, {pipeline_mode = #tpu.pipeline_mode<synchronous>, transform_indices = @transform_6, window_bounds = array<i64: 1, 128>}, {pipeline_mode = #tpu.pipeline_mode<synchronous>, transform_indices = @transform_7, window_bounds = array<i64: 32, 128>}, {pipeline_mode = #tpu.pipeline_mode<synchronous>, transform_indices = @transform_8, window_bounds = array<i64: 32, 128>}, {pipeline_mode = #tpu.pipeline_mode<synchronous>, transform_indices = @transform_9, window_bounds = array<i64: 1, 128>}, {pipeline_mode = #tpu.pipeline_mode<synchronous>, transform_indices = @transform_10, window_bounds = array<i64: 1, 128>}, {pipeline_mode = #tpu.pipeline_mode<synchronous>, transform_indices = @transform_11, window_bounds = array<i64: 32, 16>}, {pipeline_mode = #tpu.pipeline_mode<synchronous>, transform_indices = @transform_12, window_bounds = array<i64: 1, 16>}, {pipeline_mode = #tpu.pipeline_mode<synchronous>, transform_indices = @transform_13, window_bounds = array<i64: 64, 16>}, {pipeline_mode = #tpu.pipeline_mode<synchronous>, transform_indices = @transform_14, window_bounds = array<i64: 2, 8, 32>}]} {
    %c0 = arith.constant 0 : index
    %c0_0 = arith.constant 0 : index
    %0 = vector.load %arg3[%c0, %c0_0] : memref<8x1xi32, #tpu.memory_space<vmem>>, vector<8x1xi32>
    %c0_1 = arith.constant 0 : index
    %c0_2 = arith.constant 0 : index
    %1 = vector.load %arg1[%c0_1, %c0_2] : memref<64x8xf32, #tpu.memory_space<vmem>>, vector<64x8xf32>
    %2 = arith.truncf %1 : vector<64x8xf32> to vector<64x8xbf16>
    %c0_3 = arith.constant 0 : index
    %c0_4 = arith.constant 0 : index
    %3 = vector.load %arg4[%c0_3, %c0_4] : memref<8x128xbf16, #tpu.memory_space<vmem>>, vector<8x128xbf16>
    %cst = arith.constant dense<0.000000e+00> : vector<64x128xf32>
    %4 = tpu.matmul %2, %3, %cst {dimension_numbers = #tpu.dot_dimension_numbers<[1], [0], [0], [1], [0, 0, 1, 1], [], []>} : vector<64x8xbf16>, vector<8x128xbf16>, vector<64x128xf32> -> vector<64x128xf32>
    %c0_5 = arith.constant 0 : index
    %c0_6 = arith.constant 0 : index
    %5 = vector.load %arg6[%c0_5, %c0_6] : memref<1x128xf32, #tpu.memory_space<vmem>>, vector<1x128xf32>
    %6 = vector.broadcast %5 : vector<1x128xf32> to vector<64x128xf32>
    %7 = arith.addf %4, %6 : vector<64x128xf32>
    %c0_7 = arith.constant 0 : index
    %c0_8 = arith.constant 0 : index
    %8 = vector.load %arg17[%c0_7, %c0_8] : memref<64x128xf32, #tpu.memory_space<vmem>>, vector<64x128xf32>
    tpu.vector_store %arg17[%c0_7, %c0_8], %7 {strides = array<i32>} : memref<64x128xf32, #tpu.memory_space<vmem>>, vector<64x128xf32>,
    %c0_9 = arith.constant 0 : index
    %c0_10 = arith.constant 0 : index
    %9 = vector.load %arg5[%c0_9, %c0_10] : memref<32x128xbf16, #tpu.memory_space<vmem>>, vector<32x128xbf16>
    %c0_11 = arith.constant 0 : index
    %c0_12 = arith.constant 0 : index
    %10 = vector.load %arg7[%c0_11, %c0_12] : memref<1x128xf32, #tpu.memory_space<vmem>>, vector<1x128xf32>
    %c0_13 = arith.constant 0 : index
    %c0_14 = arith.constant 0 : index
    %c0_15 = arith.constant 0 : index
    %11 = vector.load %arg2[%c0_13, %c0_14, %c0_15] : memref<2x8x32xf32, #tpu.memory_space<vmem>>, vector<1x8x32xf32>
    %12 = vector.shape_cast %11 : vector<1x8x32xf32> to vector<8x32xf32>
    %c0_i32 = arith.constant 0 : i32
    %c8_i32 = arith.constant 8 : i32
    %13 = arith.muli %c0_i32, %c8_i32 : i32
    %14 = tpu.assume_multiple %13, 8 : i32
    %15 = arith.index_cast %14 : i32 to index
    %c0_16 = arith.constant 0 : index
    %16 = vector.load %arg17[%15, %c0_16] : memref<64x128xf32, #tpu.memory_space<vmem>>, vector<8x128xf32>
    %17 = arith.truncf %12 : vector<8x32xf32> to vector<8x32xbf16>
    %cst_17 = arith.constant dense<0.000000e+00> : vector<8x128xf32>
    %18 = tpu.matmul %17, %9, %cst_17 {dimension_numbers = #tpu.dot_dimension_numbers<[1], [0], [0], [1], [0, 0, 1, 1], [], []>} : vector<8x32xbf16>, vector<32x128xbf16>, vector<8x128xf32> -> vector<8x128xf32>
    %19 = vector.broadcast %10 : vector<1x128xf32> to vector<8x128xf32>
    %20 = arith.addf %18, %19 : vector<8x128xf32>
    %21 = vector.extract_strided_slice %16 {offsets = [0, 0], sizes = [8, 32], strides = [1, 1]} : vector<8x128xf32> to vector<8x32xf32>
    %22 = vector.extract_strided_slice %20 {offsets = [0, 0], sizes = [8, 32], strides = [1, 1]} : vector<8x128xf32> to vector<8x32xf32>
    %23 = arith.addf %21, %22 : vector<8x32xf32>
    %24 = arith.negf %23 : vector<8x32xf32>
    %25 = math.exp %24 : vector<8x32xf32>
    %cst_18 = arith.constant 1.000000e+00 : f32
    %26 = vector.broadcast %cst_18 : f32 to vector<8x32xf32>
    %27 = arith.addf %26, %25 : vector<8x32xf32>
    %28 = arith.divf %26, %27 : vector<8x32xf32>
    %29 = vector.extract_strided_slice %16 {offsets = [0, 32], sizes = [8, 32], strides = [1, 1]} : vector<8x128xf32> to vector<8x32xf32>
    %30 = vector.extract_strided_slice %20 {offsets = [0, 32], sizes = [8, 32], strides = [1, 1]} : vector<8x128xf32> to vector<8x32xf32>
    %31 = arith.addf %29, %30 : vector<8x32xf32>
    %32 = arith.negf %31 : vector<8x32xf32>
    %33 = math.exp %32 : vector<8x32xf32>
    %cst_19 = arith.constant 1.000000e+00 : f32
    %34 = vector.broadcast %cst_19 : f32 to vector<8x32xf32>
    %35 = arith.addf %34, %33 : vector<8x32xf32>
    %36 = arith.divf %34, %35 : vector<8x32xf32>
    %37 = vector.extract_strided_slice %16 {offsets = [0, 64], sizes = [8, 32], strides = [1, 1]} : vector<8x128xf32> to vector<8x32xf32>
    %38 = vector.extract_strided_slice %20 {offsets = [0, 64], sizes = [8, 32], strides = [1, 1]} : vector<8x128xf32> to vector<8x32xf32>
    %39 = arith.mulf %28, %38 : vector<8x32xf32>
    %40 = arith.addf %37, %39 : vector<8x32xf32>
    %41 = math.tanh %40 : vector<8x32xf32>
    %42 = arith.subf %12, %41 : vector<8x32xf32>
    %43 = arith.mulf %36, %42 : vector<8x32xf32>
    %44 = arith.addf %41, %43 : vector<8x32xf32>
    %45 = vector.broadcast %c0_i32 : i32 to vector<8x1xi32>
    %46 = arith.cmpi sgt, %0, %45 : vector<8x1xi32>
    %47 = arith.extui %46 : vector<8x1xi1> to vector<8x1xi32>
    %48 = arith.sitofp %47 : vector<8x1xi32> to vector<8x1xf32>
    %49 = vector.broadcast %48 : vector<8x1xf32> to vector<8x32xf32>
    %50 = arith.mulf %49, %44 : vector<8x32xf32>
    %51 = arith.index_cast %14 : i32 to index
    %c0_20 = arith.constant 0 : index
    %52 = vector.load %arg16[%51, %c0_20] : memref<64x32xf32, #tpu.memory_space<vmem>>, vector<8x32xf32>
    tpu.vector_store %arg16[%51, %c0_20], %50 {strides = array<i32>} : memref<64x32xf32, #tpu.memory_space<vmem>>, vector<8x32xf32>,
    %53 = arith.subf %44, %12 : vector<8x32xf32>
    %54 = vector.broadcast %48 : vector<8x1xf32> to vector<8x32xf32>
    %55 = arith.mulf %54, %53 : vector<8x32xf32>
    %56 = arith.addf %12, %55 : vector<8x32xf32>
    %c1_i32 = arith.constant 1 : i32
    %c8_i32_21 = arith.constant 8 : i32
    %57 = arith.muli %c1_i32, %c8_i32_21 : i32
    %58 = tpu.assume_multiple %57, 8 : i32
    %59 = arith.index_cast %58 : i32 to index
    %c0_22 = arith.constant 0 : index
    %60 = vector.load %arg17[%59, %c0_22] : memref<64x128xf32, #tpu.memory_space<vmem>>, vector<8x128xf32>
    %61 = arith.truncf %56 : vector<8x32xf32> to vector<8x32xbf16>
    %cst_23 = arith.constant dense<0.000000e+00> : vector<8x128xf32>
    %62 = tpu.matmul %61, %9, %cst_23 {dimension_numbers = #tpu.dot_dimension_numbers<[1], [0], [0], [1], [0, 0, 1, 1], [], []>} : vector<8x32xbf16>, vector<32x128xbf16>, vector<8x128xf32> -> vector<8x128xf32>
    %63 = vector.broadcast %10 : vector<1x128xf32> to vector<8x128xf32>
    %64 = arith.addf %62, %63 : vector<8x128xf32>
    %65 = vector.extract_strided_slice %60 {offsets = [0, 0], sizes = [8, 32], strides = [1, 1]} : vector<8x128xf32> to vector<8x32xf32>
    %66 = vector.extract_strided_slice %64 {offsets = [0, 0], sizes = [8, 32], strides = [1, 1]} : vector<8x128xf32> to vector<8x32xf32>
    %67 = arith.addf %65, %66 : vector<8x32xf32>
    %68 = arith.negf %67 : vector<8x32xf32>
    %69 = math.exp %68 : vector<8x32xf32>
    %cst_24 = arith.constant 1.000000e+00 : f32
    %70 = vector.broadcast %cst_24 : f32 to vector<8x32xf32>
    %71 = arith.addf %70, %69 : vector<8x32xf32>
    %72 = arith.divf %70, %71 : vector<8x32xf32>
    %73 = vector.extract_strided_slice %60 {offsets = [0, 32], sizes = [8, 32], strides = [1, 1]} : vector<8x128xf32> to vector<8x32xf32>
    %74 = vector.extract_strided_slice %64 {offsets = [0, 32], sizes = [8, 32], strides = [1, 1]} : vector<8x128xf32> to vector<8x32xf32>
    %75 = arith.addf %73, %74 : vector<8x32xf32>
    %76 = arith.negf %75 : vector<8x32xf32>
    %77 = math.exp %76 : vector<8x32xf32>
    %cst_25 = arith.constant 1.000000e+00 : f32
    %78 = vector.broadcast %cst_25 : f32 to vector<8x32xf32>
    %79 = arith.addf %78, %77 : vector<8x32xf32>
    %80 = arith.divf %78, %79 : vector<8x32xf32>
    %81 = vector.extract_strided_slice %60 {offsets = [0, 64], sizes = [8, 32], strides = [1, 1]} : vector<8x128xf32> to vector<8x32xf32>
    %82 = vector.extract_strided_slice %64 {offsets = [0, 64], sizes = [8, 32], strides = [1, 1]} : vector<8x128xf32> to vector<8x32xf32>
    %83 = arith.mulf %72, %82 : vector<8x32xf32>
    %84 = arith.addf %81, %83 : vector<8x32xf32>
    %85 = math.tanh %84 : vector<8x32xf32>
    %86 = arith.subf %56, %85 : vector<8x32xf32>
    %87 = arith.mulf %80, %86 : vector<8x32xf32>
    %88 = arith.addf %85, %87 : vector<8x32xf32>
    %89 = vector.broadcast %c1_i32 : i32 to vector<8x1xi32>
    %90 = arith.cmpi sgt, %0, %89 : vector<8x1xi32>
    %91 = arith.extui %90 : vector<8x1xi1> to vector<8x1xi32>
    %92 = arith.sitofp %91 : vector<8x1xi32> to vector<8x1xf32>
    %93 = vector.broadcast %92 : vector<8x1xf32> to vector<8x32xf32>
    %94 = arith.mulf %93, %88 : vector<8x32xf32>
    %95 = arith.index_cast %58 : i32 to index
    %c0_26 = arith.constant 0 : index
    %96 = vector.load %arg16[%95, %c0_26] : memref<64x32xf32, #tpu.memory_space<vmem>>, vector<8x32xf32>
    tpu.vector_store %arg16[%95, %c0_26], %94 {strides = array<i32>} : memref<64x32xf32, #tpu.memory_space<vmem>>, vector<8x32xf32>,
    %97 = arith.subf %88, %56 : vector<8x32xf32>
    %98 = vector.broadcast %92 : vector<8x1xf32> to vector<8x32xf32>
    %99 = arith.mulf %98, %97 : vector<8x32xf32>
    %100 = arith.addf %56, %99 : vector<8x32xf32>
    %c2_i32 = arith.constant 2 : i32
    %c8_i32_27 = arith.constant 8 : i32
    %101 = arith.muli %c2_i32, %c8_i32_27 : i32
    %102 = tpu.assume_multiple %101, 8 : i32
    %103 = arith.index_cast %102 : i32 to index
    %c0_28 = arith.constant 0 : index
    %104 = vector.load %arg17[%103, %c0_28] : memref<64x128xf32, #tpu.memory_space<vmem>>, vector<8x128xf32>
    %105 = arith.truncf %100 : vector<8x32xf32> to vector<8x32xbf16>
    %cst_29 = arith.constant dense<0.000000e+00> : vector<8x128xf32>
    %106 = tpu.matmul %105, %9, %cst_29 {dimension_numbers = #tpu.dot_dimension_numbers<[1], [0], [0], [1], [0, 0, 1, 1], [], []>} : vector<8x32xbf16>, vector<32x128xbf16>, vector<8x128xf32> -> vector<8x128xf32>
    %107 = vector.broadcast %10 : vector<1x128xf32> to vector<8x128xf32>
    %108 = arith.addf %106, %107 : vector<8x128xf32>
    %109 = vector.extract_strided_slice %104 {offsets = [0, 0], sizes = [8, 32], strides = [1, 1]} : vector<8x128xf32> to vector<8x32xf32>
    %110 = vector.extract_strided_slice %108 {offsets = [0, 0], sizes = [8, 32], strides = [1, 1]} : vector<8x128xf32> to vector<8x32xf32>
    %111 = arith.addf %109, %110 : vector<8x32xf32>
    %112 = arith.negf %111 : vector<8x32xf32>
    %113 = math.exp %112 : vector<8x32xf32>
    %cst_30 = arith.constant 1.000000e+00 : f32
    %114 = vector.broadcast %cst_30 : f32 to vector<8x32xf32>
    %115 = arith.addf %114, %113 : vector<8x32xf32>
    %116 = arith.divf %114, %115 : vector<8x32xf32>
    %117 = vector.extract_strided_slice %104 {offsets = [0, 32], sizes = [8, 32], strides = [1, 1]} : vector<8x128xf32> to vector<8x32xf32>
    %118 = vector.extract_strided_slice %108 {offsets = [0, 32], sizes = [8, 32], strides = [1, 1]} : vector<8x128xf32> to vector<8x32xf32>
    %119 = arith.addf %117, %118 : vector<8x32xf32>
    %120 = arith.negf %119 : vector<8x32xf32>
    %121 = math.exp %120 : vector<8x32xf32>
    %cst_31 = arith.constant 1.000000e+00 : f32
    %122 = vector.broadcast %cst_31 : f32 to vector<8x32xf32>
    %123 = arith.addf %122, %121 : vector<8x32xf32>
    %124 = arith.divf %122, %123 : vector<8x32xf32>
    %125 = vector.extract_strided_slice %104 {offsets = [0, 64], sizes = [8, 32], strides = [1, 1]} : vector<8x128xf32> to vector<8x32xf32>
    %126 = vector.extract_strided_slice %108 {offsets = [0, 64], sizes = [8, 32], strides = [1, 1]} : vector<8x128xf32> to vector<8x32xf32>
    %127 = arith.mulf %116, %126 : vector<8x32xf32>
    %128 = arith.addf %125, %127 : vector<8x32xf32>
    %129 = math.tanh %128 : vector<8x32xf32>
    %130 = arith.subf %100, %129 : vector<8x32xf32>
    %131 = arith.mulf %124, %130 : vector<8x32xf32>
    %132 = arith.addf %129, %131 : vector<8x32xf32>
    %133 = vector.broadcast %c2_i32 : i32 to vector<8x1xi32>
    %134 = arith.cmpi sgt, %0, %133 : vector<8x1xi32>
    %135 = arith.extui %134 : vector<8x1xi1> to vector<8x1xi32>
    %136 = arith.sitofp %135 : vector<8x1xi32> to vector<8x1xf32>
    %137 = vector.broadcast %136 : vector<8x1xf32> to vector<8x32xf32>
    %138 = arith.mulf %137, %132 : vector<8x32xf32>
    %139 = arith.index_cast %102 : i32 to index
    %c0_32 = arith.constant 0 : index
    %140 = vector.load %arg16[%139, %c0_32] : memref<64x32xf32, #tpu.memory_space<vmem>>, vector<8x32xf32>
    tpu.vector_store %arg16[%139, %c0_32], %138 {strides = array<i32>} : memref<64x32xf32, #tpu.memory_space<vmem>>, vector<8x32xf32>,
    %141 = arith.subf %132, %100 : vector<8x32xf32>
    %142 = vector.broadcast %136 : vector<8x1xf32> to vector<8x32xf32>
    %143 = arith.mulf %142, %141 : vector<8x32xf32>
    %144 = arith.addf %100, %143 : vector<8x32xf32>
    %c3_i32 = arith.constant 3 : i32
    %c8_i32_33 = arith.constant 8 : i32
    %145 = arith.muli %c3_i32, %c8_i32_33 : i32
    %146 = tpu.assume_multiple %145, 8 : i32
    %147 = arith.index_cast %146 : i32 to index
    %c0_34 = arith.constant 0 : index
    %148 = vector.load %arg17[%147, %c0_34] : memref<64x128xf32, #tpu.memory_space<vmem>>, vector<8x128xf32>
    %149 = arith.truncf %144 : vector<8x32xf32> to vector<8x32xbf16>
    %cst_35 = arith.constant dense<0.000000e+00> : vector<8x128xf32>
    %150 = tpu.matmul %149, %9, %cst_35 {dimension_numbers = #tpu.dot_dimension_numbers<[1], [0], [0], [1], [0, 0, 1, 1], [], []>} : vector<8x32xbf16>, vector<32x128xbf16>, vector<8x128xf32> -> vector<8x128xf32>
    %151 = vector.broadcast %10 : vector<1x128xf32> to vector<8x128xf32>
    %152 = arith.addf %150, %151 : vector<8x128xf32>
    %153 = vector.extract_strided_slice %148 {offsets = [0, 0], sizes = [8, 32], strides = [1, 1]} : vector<8x128xf32> to vector<8x32xf32>
    %154 = vector.extract_strided_slice %152 {offsets = [0, 0], sizes = [8, 32], strides = [1, 1]} : vector<8x128xf32> to vector<8x32xf32>
    %155 = arith.addf %153, %154 : vector<8x32xf32>
    %156 = arith.negf %155 : vector<8x32xf32>
    %157 = math.exp %156 : vector<8x32xf32>
    %cst_36 = arith.constant 1.000000e+00 : f32
    %158 = vector.broadcast %cst_36 : f32 to vector<8x32xf32>
    %159 = arith.addf %158, %157 : vector<8x32xf32>
    %160 = arith.divf %158, %159 : vector<8x32xf32>
    %161 = vector.extract_strided_slice %148 {offsets = [0, 32], sizes = [8, 32], strides = [1, 1]} : vector<8x128xf32> to vector<8x32xf32>
    %162 = vector.extract_strided_slice %152 {offsets = [0, 32], sizes = [8, 32], strides = [1, 1]} : vector<8x128xf32> to vector<8x32xf32>
    %163 = arith.addf %161, %162 : vector<8x32xf32>
    %164 = arith.negf %163 : vector<8x32xf32>
    %165 = math.exp %164 : vector<8x32xf32>
    %cst_37 = arith.constant 1.000000e+00 : f32
    %166 = vector.broadcast %cst_37 : f32 to vector<8x32xf32>
    %167 = arith.addf %166, %165 : vector<8x32xf32>
    %168 = arith.divf %166, %167 : vector<8x32xf32>
    %169 = vector.extract_strided_slice %148 {offsets = [0, 64], sizes = [8, 32], strides = [1, 1]} : vector<8x128xf32> to vector<8x32xf32>
    %170 = vector.extract_strided_slice %152 {offsets = [0, 64], sizes = [8, 32], strides = [1, 1]} : vector<8x128xf32> to vector<8x32xf32>
    %171 = arith.mulf %160, %170 : vector<8x32xf32>
    %172 = arith.addf %169, %171 : vector<8x32xf32>
    %173 = math.tanh %172 : vector<8x32xf32>
    %174 = arith.subf %144, %173 : vector<8x32xf32>
    %175 = arith.mulf %168, %174 : vector<8x32xf32>
    %176 = arith.addf %173, %175 : vector<8x32xf32>
    %177 = vector.broadcast %c3_i32 : i32 to vector<8x1xi32>
    %178 = arith.cmpi sgt, %0, %177 : vector<8x1xi32>
    %179 = arith.extui %178 : vector<8x1xi1> to vector<8x1xi32>
    %180 = arith.sitofp %179 : vector<8x1xi32> to vector<8x1xf32>
    %181 = vector.broadcast %180 : vector<8x1xf32> to vector<8x32xf32>
    %182 = arith.mulf %181, %176 : vector<8x32xf32>
    %183 = arith.index_cast %146 : i32 to index
    %c0_38 = arith.constant 0 : index
    %184 = vector.load %arg16[%183, %c0_38] : memref<64x32xf32, #tpu.memory_space<vmem>>, vector<8x32xf32>
    tpu.vector_store %arg16[%183, %c0_38], %182 {strides = array<i32>} : memref<64x32xf32, #tpu.memory_space<vmem>>, vector<8x32xf32>,
    %185 = arith.subf %176, %144 : vector<8x32xf32>
    %186 = vector.broadcast %180 : vector<8x1xf32> to vector<8x32xf32>
    %187 = arith.mulf %186, %185 : vector<8x32xf32>
    %188 = arith.addf %144, %187 : vector<8x32xf32>
    %c4_i32 = arith.constant 4 : i32
    %c8_i32_39 = arith.constant 8 : i32
    %189 = arith.muli %c4_i32, %c8_i32_39 : i32
    %190 = tpu.assume_multiple %189, 8 : i32
    %191 = arith.index_cast %190 : i32 to index
    %c0_40 = arith.constant 0 : index
    %192 = vector.load %arg17[%191, %c0_40] : memref<64x128xf32, #tpu.memory_space<vmem>>, vector<8x128xf32>
    %193 = arith.truncf %188 : vector<8x32xf32> to vector<8x32xbf16>
    %cst_41 = arith.constant dense<0.000000e+00> : vector<8x128xf32>
    %194 = tpu.matmul %193, %9, %cst_41 {dimension_numbers = #tpu.dot_dimension_numbers<[1], [0], [0], [1], [0, 0, 1, 1], [], []>} : vector<8x32xbf16>, vector<32x128xbf16>, vector<8x128xf32> -> vector<8x128xf32>
    %195 = vector.broadcast %10 : vector<1x128xf32> to vector<8x128xf32>
    %196 = arith.addf %194, %195 : vector<8x128xf32>
    %197 = vector.extract_strided_slice %192 {offsets = [0, 0], sizes = [8, 32], strides = [1, 1]} : vector<8x128xf32> to vector<8x32xf32>
    %198 = vector.extract_strided_slice %196 {offsets = [0, 0], sizes = [8, 32], strides = [1, 1]} : vector<8x128xf32> to vector<8x32xf32>
    %199 = arith.addf %197, %198 : vector<8x32xf32>
    %200 = arith.negf %199 : vector<8x32xf32>
    %201 = math.exp %200 : vector<8x32xf32>
    %cst_42 = arith.constant 1.000000e+00 : f32
    %202 = vector.broadcast %cst_42 : f32 to vector<8x32xf32>
    %203 = arith.addf %202, %201 : vector<8x32xf32>
    %204 = arith.divf %202, %203 : vector<8x32xf32>
    %205 = vector.extract_strided_slice %192 {offsets = [0, 32], sizes = [8, 32], strides = [1, 1]} : vector<8x128xf32> to vector<8x32xf32>
    %206 = vector.extract_strided_slice %196 {offsets = [0, 32], sizes = [8, 32], strides = [1, 1]} : vector<8x128xf32> to vector<8x32xf32>
    %207 = arith.addf %205, %206 : vector<8x32xf32>
    %208 = arith.negf %207 : vector<8x32xf32>
    %209 = math.exp %208 : vector<8x32xf32>
    %cst_43 = arith.constant 1.000000e+00 : f32
    %210 = vector.broadcast %cst_43 : f32 to vector<8x32xf32>
    %211 = arith.addf %210, %209 : vector<8x32xf32>
    %212 = arith.divf %210, %211 : vector<8x32xf32>
    %213 = vector.extract_strided_slice %192 {offsets = [0, 64], sizes = [8, 32], strides = [1, 1]} : vector<8x128xf32> to vector<8x32xf32>
    %214 = vector.extract_strided_slice %196 {offsets = [0, 64], sizes = [8, 32], strides = [1, 1]} : vector<8x128xf32> to vector<8x32xf32>
    %215 = arith.mulf %204, %214 : vector<8x32xf32>
    %216 = arith.addf %213, %215 : vector<8x32xf32>
    %217 = math.tanh %216 : vector<8x32xf32>
    %218 = arith.subf %188, %217 : vector<8x32xf32>
    %219 = arith.mulf %212, %218 : vector<8x32xf32>
    %220 = arith.addf %217, %219 : vector<8x32xf32>
    %221 = vector.broadcast %c4_i32 : i32 to vector<8x1xi32>
    %222 = arith.cmpi sgt, %0, %221 : vector<8x1xi32>
    %223 = arith.extui %222 : vector<8x1xi1> to vector<8x1xi32>
    %224 = arith.sitofp %223 : vector<8x1xi32> to vector<8x1xf32>
    %225 = vector.broadcast %224 : vector<8x1xf32> to vector<8x32xf32>
    %226 = arith.mulf %225, %220 : vector<8x32xf32>
    %227 = arith.index_cast %190 : i32 to index
    %c0_44 = arith.constant 0 : index
    %228 = vector.load %arg16[%227, %c0_44] : memref<64x32xf32, #tpu.memory_space<vmem>>, vector<8x32xf32>
    tpu.vector_store %arg16[%227, %c0_44], %226 {strides = array<i32>} : memref<64x32xf32, #tpu.memory_space<vmem>>, vector<8x32xf32>,
    %229 = arith.subf %220, %188 : vector<8x32xf32>
    %230 = vector.broadcast %224 : vector<8x1xf32> to vector<8x32xf32>
    %231 = arith.mulf %230, %229 : vector<8x32xf32>
    %232 = arith.addf %188, %231 : vector<8x32xf32>
    %c5_i32 = arith.constant 5 : i32
    %c8_i32_45 = arith.constant 8 : i32
    %233 = arith.muli %c5_i32, %c8_i32_45 : i32
    %234 = tpu.assume_multiple %233, 8 : i32
    %235 = arith.index_cast %234 : i32 to index
    %c0_46 = arith.constant 0 : index
    %236 = vector.load %arg17[%235, %c0_46] : memref<64x128xf32, #tpu.memory_space<vmem>>, vector<8x128xf32>
    %237 = arith.truncf %232 : vector<8x32xf32> to vector<8x32xbf16>
    %cst_47 = arith.constant dense<0.000000e+00> : vector<8x128xf32>
    %238 = tpu.matmul %237, %9, %cst_47 {dimension_numbers = #tpu.dot_dimension_numbers<[1], [0], [0], [1], [0, 0, 1, 1], [], []>} : vector<8x32xbf16>, vector<32x128xbf16>, vector<8x128xf32> -> vector<8x128xf32>
    %239 = vector.broadcast %10 : vector<1x128xf32> to vector<8x128xf32>
    %240 = arith.addf %238, %239 : vector<8x128xf32>
    %241 = vector.extract_strided_slice %236 {offsets = [0, 0], sizes = [8, 32], strides = [1, 1]} : vector<8x128xf32> to vector<8x32xf32>
    %242 = vector.extract_strided_slice %240 {offsets = [0, 0], sizes = [8, 32], strides = [1, 1]} : vector<8x128xf32> to vector<8x32xf32>
    %243 = arith.addf %241, %242 : vector<8x32xf32>
    %244 = arith.negf %243 : vector<8x32xf32>
    %245 = math.exp %244 : vector<8x32xf32>
    %cst_48 = arith.constant 1.000000e+00 : f32
    %246 = vector.broadcast %cst_48 : f32 to vector<8x32xf32>
    %247 = arith.addf %246, %245 : vector<8x32xf32>
    %248 = arith.divf %246, %247 : vector<8x32xf32>
    %249 = vector.extract_strided_slice %236 {offsets = [0, 32], sizes = [8, 32], strides = [1, 1]} : vector<8x128xf32> to vector<8x32xf32>
    %250 = vector.extract_strided_slice %240 {offsets = [0, 32], sizes = [8, 32], strides = [1, 1]} : vector<8x128xf32> to vector<8x32xf32>
    %251 = arith.addf %249, %250 : vector<8x32xf32>
    %252 = arith.negf %251 : vector<8x32xf32>
    %253 = math.exp %252 : vector<8x32xf32>
    %cst_49 = arith.constant 1.000000e+00 : f32
    %254 = vector.broadcast %cst_49 : f32 to vector<8x32xf32>
    %255 = arith.addf %254, %253 : vector<8x32xf32>
    %256 = arith.divf %254, %255 : vector<8x32xf32>
    %257 = vector.extract_strided_slice %236 {offsets = [0, 64], sizes = [8, 32], strides = [1, 1]} : vector<8x128xf32> to vector<8x32xf32>
    %258 = vector.extract_strided_slice %240 {offsets = [0, 64], sizes = [8, 32], strides = [1, 1]} : vector<8x128xf32> to vector<8x32xf32>
    %259 = arith.mulf %248, %258 : vector<8x32xf32>
    %260 = arith.addf %257, %259 : vector<8x32xf32>
    %261 = math.tanh %260 : vector<8x32xf32>
    %262 = arith.subf %232, %261 : vector<8x32xf32>
    %263 = arith.mulf %256, %262 : vector<8x32xf32>
    %264 = arith.addf %261, %263 : vector<8x32xf32>
    %265 = vector.broadcast %c5_i32 : i32 to vector<8x1xi32>
    %266 = arith.cmpi sgt, %0, %265 : vector<8x1xi32>
    %267 = arith.extui %266 : vector<8x1xi1> to vector<8x1xi32>
    %268 = arith.sitofp %267 : vector<8x1xi32> to vector<8x1xf32>
    %269 = vector.broadcast %268 : vector<8x1xf32> to vector<8x32xf32>
    %270 = arith.mulf %269, %264 : vector<8x32xf32>
    %271 = arith.index_cast %234 : i32 to index
    %c0_50 = arith.constant 0 : index
    %272 = vector.load %arg16[%271, %c0_50] : memref<64x32xf32, #tpu.memory_space<vmem>>, vector<8x32xf32>
    tpu.vector_store %arg16[%271, %c0_50], %270 {strides = array<i32>} : memref<64x32xf32, #tpu.memory_space<vmem>>, vector<8x32xf32>,
    %273 = arith.subf %264, %232 : vector<8x32xf32>
    %274 = vector.broadcast %268 : vector<8x1xf32> to vector<8x32xf32>
    %275 = arith.mulf %274, %273 : vector<8x32xf32>
    %276 = arith.addf %232, %275 : vector<8x32xf32>
    %c6_i32 = arith.constant 6 : i32
    %c8_i32_51 = arith.constant 8 : i32
    %277 = arith.muli %c6_i32, %c8_i32_51 : i32
    %278 = tpu.assume_multiple %277, 8 : i32
    %279 = arith.index_cast %278 : i32 to index
    %c0_52 = arith.constant 0 : index
    %280 = vector.load %arg17[%279, %c0_52] : memref<64x128xf32, #tpu.memory_space<vmem>>, vector<8x128xf32>
    %281 = arith.truncf %276 : vector<8x32xf32> to vector<8x32xbf16>
    %cst_53 = arith.constant dense<0.000000e+00> : vector<8x128xf32>
    %282 = tpu.matmul %281, %9, %cst_53 {dimension_numbers = #tpu.dot_dimension_numbers<[1], [0], [0], [1], [0, 0, 1, 1], [], []>} : vector<8x32xbf16>, vector<32x128xbf16>, vector<8x128xf32> -> vector<8x128xf32>
    %283 = vector.broadcast %10 : vector<1x128xf32> to vector<8x128xf32>
    %284 = arith.addf %282, %283 : vector<8x128xf32>
    %285 = vector.extract_strided_slice %280 {offsets = [0, 0], sizes = [8, 32], strides = [1, 1]} : vector<8x128xf32> to vector<8x32xf32>
    %286 = vector.extract_strided_slice %284 {offsets = [0, 0], sizes = [8, 32], strides = [1, 1]} : vector<8x128xf32> to vector<8x32xf32>
    %287 = arith.addf %285, %286 : vector<8x32xf32>
    %288 = arith.negf %287 : vector<8x32xf32>
    %289 = math.exp %288 : vector<8x32xf32>
    %cst_54 = arith.constant 1.000000e+00 : f32
    %290 = vector.broadcast %cst_54 : f32 to vector<8x32xf32>
    %291 = arith.addf %290, %289 : vector<8x32xf32>
    %292 = arith.divf %290, %291 : vector<8x32xf32>
    %293 = vector.extract_strided_slice %280 {offsets = [0, 32], sizes = [8, 32], strides = [1, 1]} : vector<8x128xf32> to vector<8x32xf32>
    %294 = vector.extract_strided_slice %284 {offsets = [0, 32], sizes = [8, 32], strides = [1, 1]} : vector<8x128xf32> to vector<8x32xf32>
    %295 = arith.addf %293, %294 : vector<8x32xf32>
    %296 = arith.negf %295 : vector<8x32xf32>
    %297 = math.exp %296 : vector<8x32xf32>
    %cst_55 = arith.constant 1.000000e+00 : f32
    %298 = vector.broadcast %cst_55 : f32 to vector<8x32xf32>
    %299 = arith.addf %298, %297 : vector<8x32xf32>
    %300 = arith.divf %298, %299 : vector<8x32xf32>
    %301 = vector.extract_strided_slice %280 {offsets = [0, 64], sizes = [8, 32], strides = [1, 1]} : vector<8x128xf32> to vector<8x32xf32>
    %302 = vector.extract_strided_slice %284 {offsets = [0, 64], sizes = [8, 32], strides = [1, 1]} : vector<8x128xf32> to vector<8x32xf32>
    %303 = arith.mulf %292, %302 : vector<8x32xf32>
    %304 = arith.addf %301, %303 : vector<8x32xf32>
    %305 = math.tanh %304 : vector<8x32xf32>
    %306 = arith.subf %276, %305 : vector<8x32xf32>
    %307 = arith.mulf %300, %306 : vector<8x32xf32>
    %308 = arith.addf %305, %307 : vector<8x32xf32>
    %309 = vector.broadcast %c6_i32 : i32 to vector<8x1xi32>
    %310 = arith.cmpi sgt, %0, %309 : vector<8x1xi32>
    %311 = arith.extui %310 : vector<8x1xi1> to vector<8x1xi32>
    %312 = arith.sitofp %311 : vector<8x1xi32> to vector<8x1xf32>
    %313 = vector.broadcast %312 : vector<8x1xf32> to vector<8x32xf32>
    %314 = arith.mulf %313, %308 : vector<8x32xf32>
    %315 = arith.index_cast %278 : i32 to index
    %c0_56 = arith.constant 0 : index
    %316 = vector.load %arg16[%315, %c0_56] : memref<64x32xf32, #tpu.memory_space<vmem>>, vector<8x32xf32>
    tpu.vector_store %arg16[%315, %c0_56], %314 {strides = array<i32>} : memref<64x32xf32, #tpu.memory_space<vmem>>, vector<8x32xf32>,
    %317 = arith.subf %308, %276 : vector<8x32xf32>
    %318 = vector.broadcast %312 : vector<8x1xf32> to vector<8x32xf32>
    %319 = arith.mulf %318, %317 : vector<8x32xf32>
    %320 = arith.addf %276, %319 : vector<8x32xf32>
    %c7_i32 = arith.constant 7 : i32
    %c8_i32_57 = arith.constant 8 : i32
    %321 = arith.muli %c7_i32, %c8_i32_57 : i32
    %322 = tpu.assume_multiple %321, 8 : i32
    %323 = arith.index_cast %322 : i32 to index
    %c0_58 = arith.constant 0 : index
    %324 = vector.load %arg17[%323, %c0_58] : memref<64x128xf32, #tpu.memory_space<vmem>>, vector<8x128xf32>
    %325 = arith.truncf %320 : vector<8x32xf32> to vector<8x32xbf16>
    %cst_59 = arith.constant dense<0.000000e+00> : vector<8x128xf32>
    %326 = tpu.matmul %325, %9, %cst_59 {dimension_numbers = #tpu.dot_dimension_numbers<[1], [0], [0], [1], [0, 0, 1, 1], [], []>} : vector<8x32xbf16>, vector<32x128xbf16>, vector<8x128xf32> -> vector<8x128xf32>
    %327 = vector.broadcast %10 : vector<1x128xf32> to vector<8x128xf32>
    %328 = arith.addf %326, %327 : vector<8x128xf32>
    %329 = vector.extract_strided_slice %324 {offsets = [0, 0], sizes = [8, 32], strides = [1, 1]} : vector<8x128xf32> to vector<8x32xf32>
    %330 = vector.extract_strided_slice %328 {offsets = [0, 0], sizes = [8, 32], strides = [1, 1]} : vector<8x128xf32> to vector<8x32xf32>
    %331 = arith.addf %329, %330 : vector<8x32xf32>
    %332 = arith.negf %331 : vector<8x32xf32>
    %333 = math.exp %332 : vector<8x32xf32>
    %cst_60 = arith.constant 1.000000e+00 : f32
    %334 = vector.broadcast %cst_60 : f32 to vector<8x32xf32>
    %335 = arith.addf %334, %333 : vector<8x32xf32>
    %336 = arith.divf %334, %335 : vector<8x32xf32>
    %337 = vector.extract_strided_slice %324 {offsets = [0, 32], sizes = [8, 32], strides = [1, 1]} : vector<8x128xf32> to vector<8x32xf32>
    %338 = vector.extract_strided_slice %328 {offsets = [0, 32], sizes = [8, 32], strides = [1, 1]} : vector<8x128xf32> to vector<8x32xf32>
    %339 = arith.addf %337, %338 : vector<8x32xf32>
    %340 = arith.negf %339 : vector<8x32xf32>
    %341 = math.exp %340 : vector<8x32xf32>
    %cst_61 = arith.constant 1.000000e+00 : f32
    %342 = vector.broadcast %cst_61 : f32 to vector<8x32xf32>
    %343 = arith.addf %342, %341 : vector<8x32xf32>
    %344 = arith.divf %342, %343 : vector<8x32xf32>
    %345 = vector.extract_strided_slice %324 {offsets = [0, 64], sizes = [8, 32], strides = [1, 1]} : vector<8x128xf32> to vector<8x32xf32>
    %346 = vector.extract_strided_slice %328 {offsets = [0, 64], sizes = [8, 32], strides = [1, 1]} : vector<8x128xf32> to vector<8x32xf32>
    %347 = arith.mulf %336, %346 : vector<8x32xf32>
    %348 = arith.addf %345, %347 : vector<8x32xf32>
    %349 = math.tanh %348 : vector<8x32xf32>
    %350 = arith.subf %320, %349 : vector<8x32xf32>
    %351 = arith.mulf %344, %350 : vector<8x32xf32>
    %352 = arith.addf %349, %351 : vector<8x32xf32>
    %353 = vector.broadcast %c7_i32 : i32 to vector<8x1xi32>
    %354 = arith.cmpi sgt, %0, %353 : vector<8x1xi32>
    %355 = arith.extui %354 : vector<8x1xi1> to vector<8x1xi32>
    %356 = arith.sitofp %355 : vector<8x1xi32> to vector<8x1xf32>
    %357 = vector.broadcast %356 : vector<8x1xf32> to vector<8x32xf32>
    %358 = arith.mulf %357, %352 : vector<8x32xf32>
    %359 = arith.index_cast %322 : i32 to index
    %c0_62 = arith.constant 0 : index
    %360 = vector.load %arg16[%359, %c0_62] : memref<64x32xf32, #tpu.memory_space<vmem>>, vector<8x32xf32>
    tpu.vector_store %arg16[%359, %c0_62], %358 {strides = array<i32>} : memref<64x32xf32, #tpu.memory_space<vmem>>, vector<8x32xf32>,
    %361 = arith.subf %352, %320 : vector<8x32xf32>
    %362 = vector.broadcast %356 : vector<8x1xf32> to vector<8x32xf32>
    %363 = arith.mulf %362, %361 : vector<8x32xf32>
    %364 = arith.addf %320, %363 : vector<8x32xf32>
    %c8_i32_63 = arith.constant 8 : i32
    %c0_64 = arith.constant 0 : index
    %c0_65 = arith.constant 0 : index
    %c0_66 = arith.constant 0 : index
    %365 = vector.load %arg15[%c0_64, %c0_65, %c0_66] : memref<2x8x32xf32, #tpu.memory_space<vmem>>, vector<1x8x32xf32>
    %366 = vector.shape_cast %365 : vector<1x8x32xf32> to vector<8x32xf32>
    %367 = vector.shape_cast %364 : vector<8x32xf32> to vector<1x8x32xf32>
    tpu.vector_store %arg15[%c0_64, %c0_65, %c0_66], %367 {strides = array<i32>} : memref<2x8x32xf32, #tpu.memory_space<vmem>>, vector<1x8x32xf32>,
    %c0_67 = arith.constant 0 : index
    %c0_68 = arith.constant 0 : index
    %368 = vector.load %arg16[%c0_67, %c0_68] : memref<64x32xf32, #tpu.memory_space<vmem>>, vector<64x32xf32>
    %369 = arith.truncf %368 : vector<64x32xf32> to vector<64x32xbf16>
    %c0_69 = arith.constant 0 : index
    %c0_70 = arith.constant 0 : index
    %370 = vector.load %arg8[%c0_69, %c0_70] : memref<32x128xbf16, #tpu.memory_space<vmem>>, vector<32x128xbf16>
    %cst_71 = arith.constant dense<0.000000e+00> : vector<64x128xf32>
    %371 = tpu.matmul %369, %370, %cst_71 {dimension_numbers = #tpu.dot_dimension_numbers<[1], [0], [0], [1], [0, 0, 1, 1], [], []>} : vector<64x32xbf16>, vector<32x128xbf16>, vector<64x128xf32> -> vector<64x128xf32>
    %c0_72 = arith.constant 0 : index
    %c0_73 = arith.constant 0 : index
    %372 = vector.load %arg10[%c0_72, %c0_73] : memref<1x128xf32, #tpu.memory_space<vmem>>, vector<1x128xf32>
    %373 = vector.broadcast %372 : vector<1x128xf32> to vector<64x128xf32>
    %374 = arith.addf %371, %373 : vector<64x128xf32>
    %c0_74 = arith.constant 0 : index
    %c0_75 = arith.constant 0 : index
    %375 = vector.load %arg17[%c0_74, %c0_75] : memref<64x128xf32, #tpu.memory_space<vmem>>, vector<64x128xf32>
    tpu.vector_store %arg17[%c0_74, %c0_75], %374 {strides = array<i32>} : memref<64x128xf32, #tpu.memory_space<vmem>>, vector<64x128xf32>,
    %c0_76 = arith.constant 0 : index
    %c0_77 = arith.constant 0 : index
    %376 = vector.load %arg9[%c0_76, %c0_77] : memref<32x128xbf16, #tpu.memory_space<vmem>>, vector<32x128xbf16>
    %c0_78 = arith.constant 0 : index
    %c0_79 = arith.constant 0 : index
    %377 = vector.load %arg11[%c0_78, %c0_79] : memref<1x128xf32, #tpu.memory_space<vmem>>, vector<1x128xf32>
    %c1 = arith.constant 1 : index
    %c0_80 = arith.constant 0 : index
    %c0_81 = arith.constant 0 : index
    %378 = vector.load %arg2[%c1, %c0_80, %c0_81] : memref<2x8x32xf32, #tpu.memory_space<vmem>>, vector<1x8x32xf32>
    %379 = vector.shape_cast %378 : vector<1x8x32xf32> to vector<8x32xf32>
    %c0_i32_82 = arith.constant 0 : i32
    %c8_i32_83 = arith.constant 8 : i32
    %380 = arith.muli %c0_i32_82, %c8_i32_83 : i32
    %381 = tpu.assume_multiple %380, 8 : i32
    %382 = arith.index_cast %381 : i32 to index
    %c0_84 = arith.constant 0 : index
    %383 = vector.load %arg17[%382, %c0_84] : memref<64x128xf32, #tpu.memory_space<vmem>>, vector<8x128xf32>
    %384 = arith.truncf %379 : vector<8x32xf32> to vector<8x32xbf16>
    %cst_85 = arith.constant dense<0.000000e+00> : vector<8x128xf32>
    %385 = tpu.matmul %384, %376, %cst_85 {dimension_numbers = #tpu.dot_dimension_numbers<[1], [0], [0], [1], [0, 0, 1, 1], [], []>} : vector<8x32xbf16>, vector<32x128xbf16>, vector<8x128xf32> -> vector<8x128xf32>
    %386 = vector.broadcast %377 : vector<1x128xf32> to vector<8x128xf32>
    %387 = arith.addf %385, %386 : vector<8x128xf32>
    %388 = vector.extract_strided_slice %383 {offsets = [0, 0], sizes = [8, 32], strides = [1, 1]} : vector<8x128xf32> to vector<8x32xf32>
    %389 = vector.extract_strided_slice %387 {offsets = [0, 0], sizes = [8, 32], strides = [1, 1]} : vector<8x128xf32> to vector<8x32xf32>
    %390 = arith.addf %388, %389 : vector<8x32xf32>
    %391 = arith.negf %390 : vector<8x32xf32>
    %392 = math.exp %391 : vector<8x32xf32>
    %cst_86 = arith.constant 1.000000e+00 : f32
    %393 = vector.broadcast %cst_86 : f32 to vector<8x32xf32>
    %394 = arith.addf %393, %392 : vector<8x32xf32>
    %395 = arith.divf %393, %394 : vector<8x32xf32>
    %396 = vector.extract_strided_slice %383 {offsets = [0, 32], sizes = [8, 32], strides = [1, 1]} : vector<8x128xf32> to vector<8x32xf32>
    %397 = vector.extract_strided_slice %387 {offsets = [0, 32], sizes = [8, 32], strides = [1, 1]} : vector<8x128xf32> to vector<8x32xf32>
    %398 = arith.addf %396, %397 : vector<8x32xf32>
    %399 = arith.negf %398 : vector<8x32xf32>
    %400 = math.exp %399 : vector<8x32xf32>
    %cst_87 = arith.constant 1.000000e+00 : f32
    %401 = vector.broadcast %cst_87 : f32 to vector<8x32xf32>
    %402 = arith.addf %401, %400 : vector<8x32xf32>
    %403 = arith.divf %401, %402 : vector<8x32xf32>
    %404 = vector.extract_strided_slice %383 {offsets = [0, 64], sizes = [8, 32], strides = [1, 1]} : vector<8x128xf32> to vector<8x32xf32>
    %405 = vector.extract_strided_slice %387 {offsets = [0, 64], sizes = [8, 32], strides = [1, 1]} : vector<8x128xf32> to vector<8x32xf32>
    %406 = arith.mulf %395, %405 : vector<8x32xf32>
    %407 = arith.addf %404, %406 : vector<8x32xf32>
    %408 = math.tanh %407 : vector<8x32xf32>
    %409 = arith.subf %379, %408 : vector<8x32xf32>
    %410 = arith.mulf %403, %409 : vector<8x32xf32>
    %411 = arith.addf %408, %410 : vector<8x32xf32>
    %412 = vector.broadcast %c0_i32_82 : i32 to vector<8x1xi32>
    %413 = arith.cmpi sgt, %0, %412 : vector<8x1xi32>
    %414 = arith.extui %413 : vector<8x1xi1> to vector<8x1xi32>
    %415 = arith.sitofp %414 : vector<8x1xi32> to vector<8x1xf32>
    %416 = vector.broadcast %415 : vector<8x1xf32> to vector<8x32xf32>
    %417 = arith.mulf %416, %411 : vector<8x32xf32>
    %418 = arith.index_cast %381 : i32 to index
    %c0_88 = arith.constant 0 : index
    %419 = vector.load %arg16[%418, %c0_88] : memref<64x32xf32, #tpu.memory_space<vmem>>, vector<8x32xf32>
    tpu.vector_store %arg16[%418, %c0_88], %417 {strides = array<i32>} : memref<64x32xf32, #tpu.memory_space<vmem>>, vector<8x32xf32>,
    %420 = arith.subf %411, %379 : vector<8x32xf32>
    %421 = vector.broadcast %415 : vector<8x1xf32> to vector<8x32xf32>
    %422 = arith.mulf %421, %420 : vector<8x32xf32>
    %423 = arith.addf %379, %422 : vector<8x32xf32>
    %c1_i32_89 = arith.constant 1 : i32
    %c8_i32_90 = arith.constant 8 : i32
    %424 = arith.muli %c1_i32_89, %c8_i32_90 : i32
    %425 = tpu.assume_multiple %424, 8 : i32
    %426 = arith.index_cast %425 : i32 to index
    %c0_91 = arith.constant 0 : index
    %427 = vector.load %arg17[%426, %c0_91] : memref<64x128xf32, #tpu.memory_space<vmem>>, vector<8x128xf32>
    %428 = arith.truncf %423 : vector<8x32xf32> to vector<8x32xbf16>
    %cst_92 = arith.constant dense<0.000000e+00> : vector<8x128xf32>
    %429 = tpu.matmul %428, %376, %cst_92 {dimension_numbers = #tpu.dot_dimension_numbers<[1], [0], [0], [1], [0, 0, 1, 1], [], []>} : vector<8x32xbf16>, vector<32x128xbf16>, vector<8x128xf32> -> vector<8x128xf32>
    %430 = vector.broadcast %377 : vector<1x128xf32> to vector<8x128xf32>
    %431 = arith.addf %429, %430 : vector<8x128xf32>
    %432 = vector.extract_strided_slice %427 {offsets = [0, 0], sizes = [8, 32], strides = [1, 1]} : vector<8x128xf32> to vector<8x32xf32>
    %433 = vector.extract_strided_slice %431 {offsets = [0, 0], sizes = [8, 32], strides = [1, 1]} : vector<8x128xf32> to vector<8x32xf32>
    %434 = arith.addf %432, %433 : vector<8x32xf32>
    %435 = arith.negf %434 : vector<8x32xf32>
    %436 = math.exp %435 : vector<8x32xf32>
    %cst_93 = arith.constant 1.000000e+00 : f32
    %437 = vector.broadcast %cst_93 : f32 to vector<8x32xf32>
    %438 = arith.addf %437, %436 : vector<8x32xf32>
    %439 = arith.divf %437, %438 : vector<8x32xf32>
    %440 = vector.extract_strided_slice %427 {offsets = [0, 32], sizes = [8, 32], strides = [1, 1]} : vector<8x128xf32> to vector<8x32xf32>
    %441 = vector.extract_strided_slice %431 {offsets = [0, 32], sizes = [8, 32], strides = [1, 1]} : vector<8x128xf32> to vector<8x32xf32>
    %442 = arith.addf %440, %441 : vector<8x32xf32>
    %443 = arith.negf %442 : vector<8x32xf32>
    %444 = math.exp %443 : vector<8x32xf32>
    %cst_94 = arith.constant 1.000000e+00 : f32
    %445 = vector.broadcast %cst_94 : f32 to vector<8x32xf32>
    %446 = arith.addf %445, %444 : vector<8x32xf32>
    %447 = arith.divf %445, %446 : vector<8x32xf32>
    %448 = vector.extract_strided_slice %427 {offsets = [0, 64], sizes = [8, 32], strides = [1, 1]} : vector<8x128xf32> to vector<8x32xf32>
    %449 = vector.extract_strided_slice %431 {offsets = [0, 64], sizes = [8, 32], strides = [1, 1]} : vector<8x128xf32> to vector<8x32xf32>
    %450 = arith.mulf %439, %449 : vector<8x32xf32>
    %451 = arith.addf %448, %450 : vector<8x32xf32>
    %452 = math.tanh %451 : vector<8x32xf32>
    %453 = arith.subf %423, %452 : vector<8x32xf32>
    %454 = arith.mulf %447, %453 : vector<8x32xf32>
    %455 = arith.addf %452, %454 : vector<8x32xf32>
    %456 = vector.broadcast %c1_i32_89 : i32 to vector<8x1xi32>
    %457 = arith.cmpi sgt, %0, %456 : vector<8x1xi32>
    %458 = arith.extui %457 : vector<8x1xi1> to vector<8x1xi32>
    %459 = arith.sitofp %458 : vector<8x1xi32> to vector<8x1xf32>
    %460 = vector.broadcast %459 : vector<8x1xf32> to vector<8x32xf32>
    %461 = arith.mulf %460, %455 : vector<8x32xf32>
    %462 = arith.index_cast %425 : i32 to index
    %c0_95 = arith.constant 0 : index
    %463 = vector.load %arg16[%462, %c0_95] : memref<64x32xf32, #tpu.memory_space<vmem>>, vector<8x32xf32>
    tpu.vector_store %arg16[%462, %c0_95], %461 {strides = array<i32>} : memref<64x32xf32, #tpu.memory_space<vmem>>, vector<8x32xf32>,
    %464 = arith.subf %455, %423 : vector<8x32xf32>
    %465 = vector.broadcast %459 : vector<8x1xf32> to vector<8x32xf32>
    %466 = arith.mulf %465, %464 : vector<8x32xf32>
    %467 = arith.addf %423, %466 : vector<8x32xf32>
    %c2_i32_96 = arith.constant 2 : i32
    %c8_i32_97 = arith.constant 8 : i32
    %468 = arith.muli %c2_i32_96, %c8_i32_97 : i32
    %469 = tpu.assume_multiple %468, 8 : i32
    %470 = arith.index_cast %469 : i32 to index
    %c0_98 = arith.constant 0 : index
    %471 = vector.load %arg17[%470, %c0_98] : memref<64x128xf32, #tpu.memory_space<vmem>>, vector<8x128xf32>
    %472 = arith.truncf %467 : vector<8x32xf32> to vector<8x32xbf16>
    %cst_99 = arith.constant dense<0.000000e+00> : vector<8x128xf32>
    %473 = tpu.matmul %472, %376, %cst_99 {dimension_numbers = #tpu.dot_dimension_numbers<[1], [0], [0], [1], [0, 0, 1, 1], [], []>} : vector<8x32xbf16>, vector<32x128xbf16>, vector<8x128xf32> -> vector<8x128xf32>
    %474 = vector.broadcast %377 : vector<1x128xf32> to vector<8x128xf32>
    %475 = arith.addf %473, %474 : vector<8x128xf32>
    %476 = vector.extract_strided_slice %471 {offsets = [0, 0], sizes = [8, 32], strides = [1, 1]} : vector<8x128xf32> to vector<8x32xf32>
    %477 = vector.extract_strided_slice %475 {offsets = [0, 0], sizes = [8, 32], strides = [1, 1]} : vector<8x128xf32> to vector<8x32xf32>
    %478 = arith.addf %476, %477 : vector<8x32xf32>
    %479 = arith.negf %478 : vector<8x32xf32>
    %480 = math.exp %479 : vector<8x32xf32>
    %cst_100 = arith.constant 1.000000e+00 : f32
    %481 = vector.broadcast %cst_100 : f32 to vector<8x32xf32>
    %482 = arith.addf %481, %480 : vector<8x32xf32>
    %483 = arith.divf %481, %482 : vector<8x32xf32>
    %484 = vector.extract_strided_slice %471 {offsets = [0, 32], sizes = [8, 32], strides = [1, 1]} : vector<8x128xf32> to vector<8x32xf32>
    %485 = vector.extract_strided_slice %475 {offsets = [0, 32], sizes = [8, 32], strides = [1, 1]} : vector<8x128xf32> to vector<8x32xf32>
    %486 = arith.addf %484, %485 : vector<8x32xf32>
    %487 = arith.negf %486 : vector<8x32xf32>
    %488 = math.exp %487 : vector<8x32xf32>
    %cst_101 = arith.constant 1.000000e+00 : f32
    %489 = vector.broadcast %cst_101 : f32 to vector<8x32xf32>
    %490 = arith.addf %489, %488 : vector<8x32xf32>
    %491 = arith.divf %489, %490 : vector<8x32xf32>
    %492 = vector.extract_strided_slice %471 {offsets = [0, 64], sizes = [8, 32], strides = [1, 1]} : vector<8x128xf32> to vector<8x32xf32>
    %493 = vector.extract_strided_slice %475 {offsets = [0, 64], sizes = [8, 32], strides = [1, 1]} : vector<8x128xf32> to vector<8x32xf32>
    %494 = arith.mulf %483, %493 : vector<8x32xf32>
    %495 = arith.addf %492, %494 : vector<8x32xf32>
    %496 = math.tanh %495 : vector<8x32xf32>
    %497 = arith.subf %467, %496 : vector<8x32xf32>
    %498 = arith.mulf %491, %497 : vector<8x32xf32>
    %499 = arith.addf %496, %498 : vector<8x32xf32>
    %500 = vector.broadcast %c2_i32_96 : i32 to vector<8x1xi32>
    %501 = arith.cmpi sgt, %0, %500 : vector<8x1xi32>
    %502 = arith.extui %501 : vector<8x1xi1> to vector<8x1xi32>
    %503 = arith.sitofp %502 : vector<8x1xi32> to vector<8x1xf32>
    %504 = vector.broadcast %503 : vector<8x1xf32> to vector<8x32xf32>
    %505 = arith.mulf %504, %499 : vector<8x32xf32>
    %506 = arith.index_cast %469 : i32 to index
    %c0_102 = arith.constant 0 : index
    %507 = vector.load %arg16[%506, %c0_102] : memref<64x32xf32, #tpu.memory_space<vmem>>, vector<8x32xf32>
    tpu.vector_store %arg16[%506, %c0_102], %505 {strides = array<i32>} : memref<64x32xf32, #tpu.memory_space<vmem>>, vector<8x32xf32>,
    %508 = arith.subf %499, %467 : vector<8x32xf32>
    %509 = vector.broadcast %503 : vector<8x1xf32> to vector<8x32xf32>
    %510 = arith.mulf %509, %508 : vector<8x32xf32>
    %511 = arith.addf %467, %510 : vector<8x32xf32>
    %c3_i32_103 = arith.constant 3 : i32
    %c8_i32_104 = arith.constant 8 : i32
    %512 = arith.muli %c3_i32_103, %c8_i32_104 : i32
    %513 = tpu.assume_multiple %512, 8 : i32
    %514 = arith.index_cast %513 : i32 to index
    %c0_105 = arith.constant 0 : index
    %515 = vector.load %arg17[%514, %c0_105] : memref<64x128xf32, #tpu.memory_space<vmem>>, vector<8x128xf32>
    %516 = arith.truncf %511 : vector<8x32xf32> to vector<8x32xbf16>
    %cst_106 = arith.constant dense<0.000000e+00> : vector<8x128xf32>
    %517 = tpu.matmul %516, %376, %cst_106 {dimension_numbers = #tpu.dot_dimension_numbers<[1], [0], [0], [1], [0, 0, 1, 1], [], []>} : vector<8x32xbf16>, vector<32x128xbf16>, vector<8x128xf32> -> vector<8x128xf32>
    %518 = vector.broadcast %377 : vector<1x128xf32> to vector<8x128xf32>
    %519 = arith.addf %517, %518 : vector<8x128xf32>
    %520 = vector.extract_strided_slice %515 {offsets = [0, 0], sizes = [8, 32], strides = [1, 1]} : vector<8x128xf32> to vector<8x32xf32>
    %521 = vector.extract_strided_slice %519 {offsets = [0, 0], sizes = [8, 32], strides = [1, 1]} : vector<8x128xf32> to vector<8x32xf32>
    %522 = arith.addf %520, %521 : vector<8x32xf32>
    %523 = arith.negf %522 : vector<8x32xf32>
    %524 = math.exp %523 : vector<8x32xf32>
    %cst_107 = arith.constant 1.000000e+00 : f32
    %525 = vector.broadcast %cst_107 : f32 to vector<8x32xf32>
    %526 = arith.addf %525, %524 : vector<8x32xf32>
    %527 = arith.divf %525, %526 : vector<8x32xf32>
    %528 = vector.extract_strided_slice %515 {offsets = [0, 32], sizes = [8, 32], strides = [1, 1]} : vector<8x128xf32> to vector<8x32xf32>
    %529 = vector.extract_strided_slice %519 {offsets = [0, 32], sizes = [8, 32], strides = [1, 1]} : vector<8x128xf32> to vector<8x32xf32>
    %530 = arith.addf %528, %529 : vector<8x32xf32>
    %531 = arith.negf %530 : vector<8x32xf32>
    %532 = math.exp %531 : vector<8x32xf32>
    %cst_108 = arith.constant 1.000000e+00 : f32
    %533 = vector.broadcast %cst_108 : f32 to vector<8x32xf32>
    %534 = arith.addf %533, %532 : vector<8x32xf32>
    %535 = arith.divf %533, %534 : vector<8x32xf32>
    %536 = vector.extract_strided_slice %515 {offsets = [0, 64], sizes = [8, 32], strides = [1, 1]} : vector<8x128xf32> to vector<8x32xf32>
    %537 = vector.extract_strided_slice %519 {offsets = [0, 64], sizes = [8, 32], strides = [1, 1]} : vector<8x128xf32> to vector<8x32xf32>
    %538 = arith.mulf %527, %537 : vector<8x32xf32>
    %539 = arith.addf %536, %538 : vector<8x32xf32>
    %540 = math.tanh %539 : vector<8x32xf32>
    %541 = arith.subf %511, %540 : vector<8x32xf32>
    %542 = arith.mulf %535, %541 : vector<8x32xf32>
    %543 = arith.addf %540, %542 : vector<8x32xf32>
    %544 = vector.broadcast %c3_i32_103 : i32 to vector<8x1xi32>
    %545 = arith.cmpi sgt, %0, %544 : vector<8x1xi32>
    %546 = arith.extui %545 : vector<8x1xi1> to vector<8x1xi32>
    %547 = arith.sitofp %546 : vector<8x1xi32> to vector<8x1xf32>
    %548 = vector.broadcast %547 : vector<8x1xf32> to vector<8x32xf32>
    %549 = arith.mulf %548, %543 : vector<8x32xf32>
    %550 = arith.index_cast %513 : i32 to index
    %c0_109 = arith.constant 0 : index
    %551 = vector.load %arg16[%550, %c0_109] : memref<64x32xf32, #tpu.memory_space<vmem>>, vector<8x32xf32>
    tpu.vector_store %arg16[%550, %c0_109], %549 {strides = array<i32>} : memref<64x32xf32, #tpu.memory_space<vmem>>, vector<8x32xf32>,
    %552 = arith.subf %543, %511 : vector<8x32xf32>
    %553 = vector.broadcast %547 : vector<8x1xf32> to vector<8x32xf32>
    %554 = arith.mulf %553, %552 : vector<8x32xf32>
    %555 = arith.addf %511, %554 : vector<8x32xf32>
    %c4_i32_110 = arith.constant 4 : i32
    %c8_i32_111 = arith.constant 8 : i32
    %556 = arith.muli %c4_i32_110, %c8_i32_111 : i32
    %557 = tpu.assume_multiple %556, 8 : i32
    %558 = arith.index_cast %557 : i32 to index
    %c0_112 = arith.constant 0 : index
    %559 = vector.load %arg17[%558, %c0_112] : memref<64x128xf32, #tpu.memory_space<vmem>>, vector<8x128xf32>
    %560 = arith.truncf %555 : vector<8x32xf32> to vector<8x32xbf16>
    %cst_113 = arith.constant dense<0.000000e+00> : vector<8x128xf32>
    %561 = tpu.matmul %560, %376, %cst_113 {dimension_numbers = #tpu.dot_dimension_numbers<[1], [0], [0], [1], [0, 0, 1, 1], [], []>} : vector<8x32xbf16>, vector<32x128xbf16>, vector<8x128xf32> -> vector<8x128xf32>
    %562 = vector.broadcast %377 : vector<1x128xf32> to vector<8x128xf32>
    %563 = arith.addf %561, %562 : vector<8x128xf32>
    %564 = vector.extract_strided_slice %559 {offsets = [0, 0], sizes = [8, 32], strides = [1, 1]} : vector<8x128xf32> to vector<8x32xf32>
    %565 = vector.extract_strided_slice %563 {offsets = [0, 0], sizes = [8, 32], strides = [1, 1]} : vector<8x128xf32> to vector<8x32xf32>
    %566 = arith.addf %564, %565 : vector<8x32xf32>
    %567 = arith.negf %566 : vector<8x32xf32>
    %568 = math.exp %567 : vector<8x32xf32>
    %cst_114 = arith.constant 1.000000e+00 : f32
    %569 = vector.broadcast %cst_114 : f32 to vector<8x32xf32>
    %570 = arith.addf %569, %568 : vector<8x32xf32>
    %571 = arith.divf %569, %570 : vector<8x32xf32>
    %572 = vector.extract_strided_slice %559 {offsets = [0, 32], sizes = [8, 32], strides = [1, 1]} : vector<8x128xf32> to vector<8x32xf32>
    %573 = vector.extract_strided_slice %563 {offsets = [0, 32], sizes = [8, 32], strides = [1, 1]} : vector<8x128xf32> to vector<8x32xf32>
    %574 = arith.addf %572, %573 : vector<8x32xf32>
    %575 = arith.negf %574 : vector<8x32xf32>
    %576 = math.exp %575 : vector<8x32xf32>
    %cst_115 = arith.constant 1.000000e+00 : f32
    %577 = vector.broadcast %cst_115 : f32 to vector<8x32xf32>
    %578 = arith.addf %577, %576 : vector<8x32xf32>
    %579 = arith.divf %577, %578 : vector<8x32xf32>
    %580 = vector.extract_strided_slice %559 {offsets = [0, 64], sizes = [8, 32], strides = [1, 1]} : vector<8x128xf32> to vector<8x32xf32>
    %581 = vector.extract_strided_slice %563 {offsets = [0, 64], sizes = [8, 32], strides = [1, 1]} : vector<8x128xf32> to vector<8x32xf32>
    %582 = arith.mulf %571, %581 : vector<8x32xf32>
    %583 = arith.addf %580, %582 : vector<8x32xf32>
    %584 = math.tanh %583 : vector<8x32xf32>
    %585 = arith.subf %555, %584 : vector<8x32xf32>
    %586 = arith.mulf %579, %585 : vector<8x32xf32>
    %587 = arith.addf %584, %586 : vector<8x32xf32>
    %588 = vector.broadcast %c4_i32_110 : i32 to vector<8x1xi32>
    %589 = arith.cmpi sgt, %0, %588 : vector<8x1xi32>
    %590 = arith.extui %589 : vector<8x1xi1> to vector<8x1xi32>
    %591 = arith.sitofp %590 : vector<8x1xi32> to vector<8x1xf32>
    %592 = vector.broadcast %591 : vector<8x1xf32> to vector<8x32xf32>
    %593 = arith.mulf %592, %587 : vector<8x32xf32>
    %594 = arith.index_cast %557 : i32 to index
    %c0_116 = arith.constant 0 : index
    %595 = vector.load %arg16[%594, %c0_116] : memref<64x32xf32, #tpu.memory_space<vmem>>, vector<8x32xf32>
    tpu.vector_store %arg16[%594, %c0_116], %593 {strides = array<i32>} : memref<64x32xf32, #tpu.memory_space<vmem>>, vector<8x32xf32>,
    %596 = arith.subf %587, %555 : vector<8x32xf32>
    %597 = vector.broadcast %591 : vector<8x1xf32> to vector<8x32xf32>
    %598 = arith.mulf %597, %596 : vector<8x32xf32>
    %599 = arith.addf %555, %598 : vector<8x32xf32>
    %c5_i32_117 = arith.constant 5 : i32
    %c8_i32_118 = arith.constant 8 : i32
    %600 = arith.muli %c5_i32_117, %c8_i32_118 : i32
    %601 = tpu.assume_multiple %600, 8 : i32
    %602 = arith.index_cast %601 : i32 to index
    %c0_119 = arith.constant 0 : index
    %603 = vector.load %arg17[%602, %c0_119] : memref<64x128xf32, #tpu.memory_space<vmem>>, vector<8x128xf32>
    %604 = arith.truncf %599 : vector<8x32xf32> to vector<8x32xbf16>
    %cst_120 = arith.constant dense<0.000000e+00> : vector<8x128xf32>
    %605 = tpu.matmul %604, %376, %cst_120 {dimension_numbers = #tpu.dot_dimension_numbers<[1], [0], [0], [1], [0, 0, 1, 1], [], []>} : vector<8x32xbf16>, vector<32x128xbf16>, vector<8x128xf32> -> vector<8x128xf32>
    %606 = vector.broadcast %377 : vector<1x128xf32> to vector<8x128xf32>
    %607 = arith.addf %605, %606 : vector<8x128xf32>
    %608 = vector.extract_strided_slice %603 {offsets = [0, 0], sizes = [8, 32], strides = [1, 1]} : vector<8x128xf32> to vector<8x32xf32>
    %609 = vector.extract_strided_slice %607 {offsets = [0, 0], sizes = [8, 32], strides = [1, 1]} : vector<8x128xf32> to vector<8x32xf32>
    %610 = arith.addf %608, %609 : vector<8x32xf32>
    %611 = arith.negf %610 : vector<8x32xf32>
    %612 = math.exp %611 : vector<8x32xf32>
    %cst_121 = arith.constant 1.000000e+00 : f32
    %613 = vector.broadcast %cst_121 : f32 to vector<8x32xf32>
    %614 = arith.addf %613, %612 : vector<8x32xf32>
    %615 = arith.divf %613, %614 : vector<8x32xf32>
    %616 = vector.extract_strided_slice %603 {offsets = [0, 32], sizes = [8, 32], strides = [1, 1]} : vector<8x128xf32> to vector<8x32xf32>
    %617 = vector.extract_strided_slice %607 {offsets = [0, 32], sizes = [8, 32], strides = [1, 1]} : vector<8x128xf32> to vector<8x32xf32>
    %618 = arith.addf %616, %617 : vector<8x32xf32>
    %619 = arith.negf %618 : vector<8x32xf32>
    %620 = math.exp %619 : vector<8x32xf32>
    %cst_122 = arith.constant 1.000000e+00 : f32
    %621 = vector.broadcast %cst_122 : f32 to vector<8x32xf32>
    %622 = arith.addf %621, %620 : vector<8x32xf32>
    %623 = arith.divf %621, %622 : vector<8x32xf32>
    %624 = vector.extract_strided_slice %603 {offsets = [0, 64], sizes = [8, 32], strides = [1, 1]} : vector<8x128xf32> to vector<8x32xf32>
    %625 = vector.extract_strided_slice %607 {offsets = [0, 64], sizes = [8, 32], strides = [1, 1]} : vector<8x128xf32> to vector<8x32xf32>
    %626 = arith.mulf %615, %625 : vector<8x32xf32>
    %627 = arith.addf %624, %626 : vector<8x32xf32>
    %628 = math.tanh %627 : vector<8x32xf32>
    %629 = arith.subf %599, %628 : vector<8x32xf32>
    %630 = arith.mulf %623, %629 : vector<8x32xf32>
    %631 = arith.addf %628, %630 : vector<8x32xf32>
    %632 = vector.broadcast %c5_i32_117 : i32 to vector<8x1xi32>
    %633 = arith.cmpi sgt, %0, %632 : vector<8x1xi32>
    %634 = arith.extui %633 : vector<8x1xi1> to vector<8x1xi32>
    %635 = arith.sitofp %634 : vector<8x1xi32> to vector<8x1xf32>
    %636 = vector.broadcast %635 : vector<8x1xf32> to vector<8x32xf32>
    %637 = arith.mulf %636, %631 : vector<8x32xf32>
    %638 = arith.index_cast %601 : i32 to index
    %c0_123 = arith.constant 0 : index
    %639 = vector.load %arg16[%638, %c0_123] : memref<64x32xf32, #tpu.memory_space<vmem>>, vector<8x32xf32>
    tpu.vector_store %arg16[%638, %c0_123], %637 {strides = array<i32>} : memref<64x32xf32, #tpu.memory_space<vmem>>, vector<8x32xf32>,
    %640 = arith.subf %631, %599 : vector<8x32xf32>
    %641 = vector.broadcast %635 : vector<8x1xf32> to vector<8x32xf32>
    %642 = arith.mulf %641, %640 : vector<8x32xf32>
    %643 = arith.addf %599, %642 : vector<8x32xf32>
    %c6_i32_124 = arith.constant 6 : i32
    %c8_i32_125 = arith.constant 8 : i32
    %644 = arith.muli %c6_i32_124, %c8_i32_125 : i32
    %645 = tpu.assume_multiple %644, 8 : i32
    %646 = arith.index_cast %645 : i32 to index
    %c0_126 = arith.constant 0 : index
    %647 = vector.load %arg17[%646, %c0_126] : memref<64x128xf32, #tpu.memory_space<vmem>>, vector<8x128xf32>
    %648 = arith.truncf %643 : vector<8x32xf32> to vector<8x32xbf16>
    %cst_127 = arith.constant dense<0.000000e+00> : vector<8x128xf32>
    %649 = tpu.matmul %648, %376, %cst_127 {dimension_numbers = #tpu.dot_dimension_numbers<[1], [0], [0], [1], [0, 0, 1, 1], [], []>} : vector<8x32xbf16>, vector<32x128xbf16>, vector<8x128xf32> -> vector<8x128xf32>
    %650 = vector.broadcast %377 : vector<1x128xf32> to vector<8x128xf32>
    %651 = arith.addf %649, %650 : vector<8x128xf32>
    %652 = vector.extract_strided_slice %647 {offsets = [0, 0], sizes = [8, 32], strides = [1, 1]} : vector<8x128xf32> to vector<8x32xf32>
    %653 = vector.extract_strided_slice %651 {offsets = [0, 0], sizes = [8, 32], strides = [1, 1]} : vector<8x128xf32> to vector<8x32xf32>
    %654 = arith.addf %652, %653 : vector<8x32xf32>
    %655 = arith.negf %654 : vector<8x32xf32>
    %656 = math.exp %655 : vector<8x32xf32>
    %cst_128 = arith.constant 1.000000e+00 : f32
    %657 = vector.broadcast %cst_128 : f32 to vector<8x32xf32>
    %658 = arith.addf %657, %656 : vector<8x32xf32>
    %659 = arith.divf %657, %658 : vector<8x32xf32>
    %660 = vector.extract_strided_slice %647 {offsets = [0, 32], sizes = [8, 32], strides = [1, 1]} : vector<8x128xf32> to vector<8x32xf32>
    %661 = vector.extract_strided_slice %651 {offsets = [0, 32], sizes = [8, 32], strides = [1, 1]} : vector<8x128xf32> to vector<8x32xf32>
    %662 = arith.addf %660, %661 : vector<8x32xf32>
    %663 = arith.negf %662 : vector<8x32xf32>
    %664 = math.exp %663 : vector<8x32xf32>
    %cst_129 = arith.constant 1.000000e+00 : f32
    %665 = vector.broadcast %cst_129 : f32 to vector<8x32xf32>
    %666 = arith.addf %665, %664 : vector<8x32xf32>
    %667 = arith.divf %665, %666 : vector<8x32xf32>
    %668 = vector.extract_strided_slice %647 {offsets = [0, 64], sizes = [8, 32], strides = [1, 1]} : vector<8x128xf32> to vector<8x32xf32>
    %669 = vector.extract_strided_slice %651 {offsets = [0, 64], sizes = [8, 32], strides = [1, 1]} : vector<8x128xf32> to vector<8x32xf32>
    %670 = arith.mulf %659, %669 : vector<8x32xf32>
    %671 = arith.addf %668, %670 : vector<8x32xf32>
    %672 = math.tanh %671 : vector<8x32xf32>
    %673 = arith.subf %643, %672 : vector<8x32xf32>
    %674 = arith.mulf %667, %673 : vector<8x32xf32>
    %675 = arith.addf %672, %674 : vector<8x32xf32>
    %676 = vector.broadcast %c6_i32_124 : i32 to vector<8x1xi32>
    %677 = arith.cmpi sgt, %0, %676 : vector<8x1xi32>
    %678 = arith.extui %677 : vector<8x1xi1> to vector<8x1xi32>
    %679 = arith.sitofp %678 : vector<8x1xi32> to vector<8x1xf32>
    %680 = vector.broadcast %679 : vector<8x1xf32> to vector<8x32xf32>
    %681 = arith.mulf %680, %675 : vector<8x32xf32>
    %682 = arith.index_cast %645 : i32 to index
    %c0_130 = arith.constant 0 : index
    %683 = vector.load %arg16[%682, %c0_130] : memref<64x32xf32, #tpu.memory_space<vmem>>, vector<8x32xf32>
    tpu.vector_store %arg16[%682, %c0_130], %681 {strides = array<i32>} : memref<64x32xf32, #tpu.memory_space<vmem>>, vector<8x32xf32>,
    %684 = arith.subf %675, %643 : vector<8x32xf32>
    %685 = vector.broadcast %679 : vector<8x1xf32> to vector<8x32xf32>
    %686 = arith.mulf %685, %684 : vector<8x32xf32>
    %687 = arith.addf %643, %686 : vector<8x32xf32>
    %c7_i32_131 = arith.constant 7 : i32
    %c8_i32_132 = arith.constant 8 : i32
    %688 = arith.muli %c7_i32_131, %c8_i32_132 : i32
    %689 = tpu.assume_multiple %688, 8 : i32
    %690 = arith.index_cast %689 : i32 to index
    %c0_133 = arith.constant 0 : index
    %691 = vector.load %arg17[%690, %c0_133] : memref<64x128xf32, #tpu.memory_space<vmem>>, vector<8x128xf32>
    %692 = arith.truncf %687 : vector<8x32xf32> to vector<8x32xbf16>
    %cst_134 = arith.constant dense<0.000000e+00> : vector<8x128xf32>
    %693 = tpu.matmul %692, %376, %cst_134 {dimension_numbers = #tpu.dot_dimension_numbers<[1], [0], [0], [1], [0, 0, 1, 1], [], []>} : vector<8x32xbf16>, vector<32x128xbf16>, vector<8x128xf32> -> vector<8x128xf32>
    %694 = vector.broadcast %377 : vector<1x128xf32> to vector<8x128xf32>
    %695 = arith.addf %693, %694 : vector<8x128xf32>
    %696 = vector.extract_strided_slice %691 {offsets = [0, 0], sizes = [8, 32], strides = [1, 1]} : vector<8x128xf32> to vector<8x32xf32>
    %697 = vector.extract_strided_slice %695 {offsets = [0, 0], sizes = [8, 32], strides = [1, 1]} : vector<8x128xf32> to vector<8x32xf32>
    %698 = arith.addf %696, %697 : vector<8x32xf32>
    %699 = arith.negf %698 : vector<8x32xf32>
    %700 = math.exp %699 : vector<8x32xf32>
    %cst_135 = arith.constant 1.000000e+00 : f32
    %701 = vector.broadcast %cst_135 : f32 to vector<8x32xf32>
    %702 = arith.addf %701, %700 : vector<8x32xf32>
    %703 = arith.divf %701, %702 : vector<8x32xf32>
    %704 = vector.extract_strided_slice %691 {offsets = [0, 32], sizes = [8, 32], strides = [1, 1]} : vector<8x128xf32> to vector<8x32xf32>
    %705 = vector.extract_strided_slice %695 {offsets = [0, 32], sizes = [8, 32], strides = [1, 1]} : vector<8x128xf32> to vector<8x32xf32>
    %706 = arith.addf %704, %705 : vector<8x32xf32>
    %707 = arith.negf %706 : vector<8x32xf32>
    %708 = math.exp %707 : vector<8x32xf32>
    %cst_136 = arith.constant 1.000000e+00 : f32
    %709 = vector.broadcast %cst_136 : f32 to vector<8x32xf32>
    %710 = arith.addf %709, %708 : vector<8x32xf32>
    %711 = arith.divf %709, %710 : vector<8x32xf32>
    %712 = vector.extract_strided_slice %691 {offsets = [0, 64], sizes = [8, 32], strides = [1, 1]} : vector<8x128xf32> to vector<8x32xf32>
    %713 = vector.extract_strided_slice %695 {offsets = [0, 64], sizes = [8, 32], strides = [1, 1]} : vector<8x128xf32> to vector<8x32xf32>
    %714 = arith.mulf %703, %713 : vector<8x32xf32>
    %715 = arith.addf %712, %714 : vector<8x32xf32>
    %716 = math.tanh %715 : vector<8x32xf32>
    %717 = arith.subf %687, %716 : vector<8x32xf32>
    %718 = arith.mulf %711, %717 : vector<8x32xf32>
    %719 = arith.addf %716, %718 : vector<8x32xf32>
    %720 = vector.broadcast %c7_i32_131 : i32 to vector<8x1xi32>
    %721 = arith.cmpi sgt, %0, %720 : vector<8x1xi32>
    %722 = arith.extui %721 : vector<8x1xi1> to vector<8x1xi32>
    %723 = arith.sitofp %722 : vector<8x1xi32> to vector<8x1xf32>
    %724 = vector.broadcast %723 : vector<8x1xf32> to vector<8x32xf32>
    %725 = arith.mulf %724, %719 : vector<8x32xf32>
    %726 = arith.index_cast %689 : i32 to index
    %c0_137 = arith.constant 0 : index
    %727 = vector.load %arg16[%726, %c0_137] : memref<64x32xf32, #tpu.memory_space<vmem>>, vector<8x32xf32>
    tpu.vector_store %arg16[%726, %c0_137], %725 {strides = array<i32>} : memref<64x32xf32, #tpu.memory_space<vmem>>, vector<8x32xf32>,
    %728 = arith.subf %719, %687 : vector<8x32xf32>
    %729 = vector.broadcast %723 : vector<8x1xf32> to vector<8x32xf32>
    %730 = arith.mulf %729, %728 : vector<8x32xf32>
    %731 = arith.addf %687, %730 : vector<8x32xf32>
    %c8_i32_138 = arith.constant 8 : i32
    %c1_139 = arith.constant 1 : index
    %c0_140 = arith.constant 0 : index
    %c0_141 = arith.constant 0 : index
    %732 = vector.load %arg15[%c1_139, %c0_140, %c0_141] : memref<2x8x32xf32, #tpu.memory_space<vmem>>, vector<1x8x32xf32>
    %733 = vector.shape_cast %732 : vector<1x8x32xf32> to vector<8x32xf32>
    %734 = vector.shape_cast %731 : vector<8x32xf32> to vector<1x8x32xf32>
    tpu.vector_store %arg15[%c1_139, %c0_140, %c0_141], %734 {strides = array<i32>} : memref<2x8x32xf32, #tpu.memory_space<vmem>>, vector<1x8x32xf32>,
    %c0_142 = arith.constant 0 : index
    %c0_143 = arith.constant 0 : index
    %735 = vector.load %arg16[%c0_142, %c0_143] : memref<64x32xf32, #tpu.memory_space<vmem>>, vector<64x32xf32>
    %736 = arith.truncf %735 : vector<64x32xf32> to vector<64x32xbf16>
    %c0_144 = arith.constant 0 : index
    %c0_145 = arith.constant 0 : index
    %737 = vector.load %arg12[%c0_144, %c0_145] : memref<32x16xbf16, #tpu.memory_space<vmem>>, vector<32x16xbf16>
    %cst_146 = arith.constant dense<0.000000e+00> : vector<64x16xf32>
    %738 = tpu.matmul %736, %737, %cst_146 {dimension_numbers = #tpu.dot_dimension_numbers<[1], [0], [0], [1], [0, 0, 1, 1], [], []>} : vector<64x32xbf16>, vector<32x16xbf16>, vector<64x16xf32> -> vector<64x16xf32>
    %c0_147 = arith.constant 0 : index
    %c0_148 = arith.constant 0 : index
    %739 = vector.load %arg13[%c0_147, %c0_148] : memref<1x16xf32, #tpu.memory_space<vmem>>, vector<1x16xf32>
    %740 = vector.broadcast %739 : vector<1x16xf32> to vector<64x16xf32>
    %741 = arith.addf %738, %740 : vector<64x16xf32>
    %c0_149 = arith.constant 0 : index
    %c0_150 = arith.constant 0 : index
    %742 = vector.load %arg14[%c0_149, %c0_150] : memref<64x16xf32, #tpu.memory_space<vmem>>, vector<64x16xf32>
    tpu.vector_store %arg14[%c0_149, %c0_150], %741 {strides = array<i32>} : memref<64x16xf32, #tpu.memory_space<vmem>>, vector<64x16xf32>,
    return
  }
  func.func @transform_0(%arg0: i32) -> (i32, i32) {
    %c0_i32 = arith.constant 0 : i32
    %c0_i32_0 = arith.constant 0 : i32
    %c0_i32_1 = arith.constant 0 : i32
    return %c0_i32, %c0_i32_0 : i32, i32
  }
  func.func @transform_1(%arg0: i32) -> (i32, i32, i32) {
    %c0_i32 = arith.constant 0 : i32
    %c0_i32_0 = arith.constant 0 : i32
    %c0_i32_1 = arith.constant 0 : i32
    %c0_i32_2 = arith.constant 0 : i32
    return %c0_i32, %c0_i32_0, %c0_i32_1 : i32, i32, i32
  }
  func.func @transform_2(%arg0: i32) -> (i32, i32) {
    %c0_i32 = arith.constant 0 : i32
    %c0_i32_0 = arith.constant 0 : i32
    %c0_i32_1 = arith.constant 0 : i32
    return %c0_i32, %c0_i32_0 : i32, i32
  }
  func.func @transform_3(%arg0: i32) -> (i32, i32) {
    %c0_i32 = arith.constant 0 : i32
    %c0_i32_0 = arith.constant 0 : i32
    %c0_i32_1 = arith.constant 0 : i32
    return %c0_i32, %c0_i32_0 : i32, i32
  }
  func.func @transform_4(%arg0: i32) -> (i32, i32) {
    %c0_i32 = arith.constant 0 : i32
    %c0_i32_0 = arith.constant 0 : i32
    %c0_i32_1 = arith.constant 0 : i32
    return %c0_i32, %c0_i32_0 : i32, i32
  }
  func.func @transform_5(%arg0: i32) -> (i32, i32) {
    %c0_i32 = arith.constant 0 : i32
    %c0_i32_0 = arith.constant 0 : i32
    %c0_i32_1 = arith.constant 0 : i32
    return %c0_i32, %c0_i32_0 : i32, i32
  }
  func.func @transform_6(%arg0: i32) -> (i32, i32) {
    %c0_i32 = arith.constant 0 : i32
    %c0_i32_0 = arith.constant 0 : i32
    %c0_i32_1 = arith.constant 0 : i32
    return %c0_i32, %c0_i32_0 : i32, i32
  }
  func.func @transform_7(%arg0: i32) -> (i32, i32) {
    %c0_i32 = arith.constant 0 : i32
    %c0_i32_0 = arith.constant 0 : i32
    %c0_i32_1 = arith.constant 0 : i32
    return %c0_i32, %c0_i32_0 : i32, i32
  }
  func.func @transform_8(%arg0: i32) -> (i32, i32) {
    %c0_i32 = arith.constant 0 : i32
    %c0_i32_0 = arith.constant 0 : i32
    %c0_i32_1 = arith.constant 0 : i32
    return %c0_i32, %c0_i32_0 : i32, i32
  }
  func.func @transform_9(%arg0: i32) -> (i32, i32) {
    %c0_i32 = arith.constant 0 : i32
    %c0_i32_0 = arith.constant 0 : i32
    %c0_i32_1 = arith.constant 0 : i32
    return %c0_i32, %c0_i32_0 : i32, i32
  }
  func.func @transform_10(%arg0: i32) -> (i32, i32) {
    %c0_i32 = arith.constant 0 : i32
    %c0_i32_0 = arith.constant 0 : i32
    %c0_i32_1 = arith.constant 0 : i32
    return %c0_i32, %c0_i32_0 : i32, i32
  }
  func.func @transform_11(%arg0: i32) -> (i32, i32) {
    %c0_i32 = arith.constant 0 : i32
    %c0_i32_0 = arith.constant 0 : i32
    %c0_i32_1 = arith.constant 0 : i32
    return %c0_i32, %c0_i32_0 : i32, i32
  }
  func.func @transform_12(%arg0: i32) -> (i32, i32) {
    %c0_i32 = arith.constant 0 : i32
    %c0_i32_0 = arith.constant 0 : i32
    %c0_i32_1 = arith.constant 0 : i32
    return %c0_i32, %c0_i32_0 : i32, i32
  }
  func.func @transform_13(%arg0: i32) -> (i32, i32) {
    %c0_i32 = arith.constant 0 : i32
    %c0_i32_0 = arith.constant 0 : i32
    %c0_i32_1 = arith.constant 0 : i32
    return %c0_i32, %c0_i32_0 : i32, i32
  }
  func.func @transform_14(%arg0: i32) -> (i32, i32, i32) {
    %c0_i32 = arith.constant 0 : i32
    %c0_i32_0 = arith.constant 0 : i32
    %c0_i32_1 = arith.constant 0 : i32
    %c0_i32_2 = arith.constant 0 : i32
    return %c0_i32, %c0_i32_0, %c0_i32_1 : i32, i32, i32
  }
}

</mosaic_0001>

<llo_original>
// kernel: tpu_custom_call.1
$region0: #{tpu_custom_call.1}
  #allocation0 [shape = 'u32[]', space=smem, size = 0x4, offset = 0x4, fixed_abs, tag = 'smem constant byte address 0x4 - core index']
  #allocation1 [shape = 'u32[72,128]{1,0:T(1,128)}', space=vmem, size = 0x9000, scoped, tag = 'internal scratch']
  #allocation2 [shape = 'f32[64,32]{1,0:T(8,128)}', space=vmem, size = 0x8000, scoped, tag = 'scratch operand']
  #allocation3 [shape = 'f32[64,128]{1,0:T(8,128)}', space=vmem, size = 0x8000, scoped, tag = 'scratch operand']
  %s0 = inlined_call_operand.vmem [shape: f32[64,8], index: 0, kind: input, shape index: {}]
  %s1 = inlined_call_operand.vmem [shape: f32[2,8,32], index: 1, kind: input, shape index: {}]
  %s2 = inlined_call_operand.vmem [shape: s32[8,1], index: 2, kind: input, shape index: {}]
  %s3 = inlined_call_operand.vmem [shape: bf16[8,128], index: 3, kind: input, shape index: {}]
  %s4 = inlined_call_operand.vmem [shape: bf16[32,128], index: 4, kind: input, shape index: {}]
  %s5 = inlined_call_operand.vmem [shape: f32[1,128], index: 5, kind: input, shape index: {}]
  %s6 = inlined_call_operand.vmem [shape: f32[1,128], index: 6, kind: input, shape index: {}]
  %s7 = inlined_call_operand.vmem [shape: bf16[32,128], index: 7, kind: input, shape index: {}]
  %s8 = inlined_call_operand.vmem [shape: bf16[32,128], index: 8, kind: input, shape index: {}]
  %s9 = inlined_call_operand.vmem [shape: f32[1,128], index: 9, kind: input, shape index: {}]
  %s10 = inlined_call_operand.vmem [shape: f32[1,128], index: 10, kind: input, shape index: {}]
  %s11 = inlined_call_operand.vmem [shape: bf16[32,16], index: 11, kind: input, shape index: {}]
  %s12 = inlined_call_operand.vmem [shape: f32[1,16], index: 12, kind: input, shape index: {}]
  %s13 = inlined_call_operand.vmem [shape: f32[64,16], index: 13, kind: output, shape index: {0}]
  %s14 = inlined_call_operand.hbm [shape: f32[2,8,32], index: 14, kind: output, shape index: {1}]
  %15 = xla_tuple %s13, %s14
  %s16 = sld [smem:[#allocation0]]
  $region70: #{tpu_custom_call.1} parent=0
    _
  %s18 = ssub.s32 1, %s16
  %s19 = scalar_select 0, %s18, %s16
  $region1: #{tpu_custom_call.1} parent=0
    #allocation4 [shape = 'u8[8192]{0}', space=vmem, size = 0x2000, scoped, tag = 'output window, operand 1, single buffered']
    #allocation5 [shape = 's32[1]{0}', space=sflag, size = 0x4, scoped, tag = 'scoped memory for tpu_custom_call.1']
    %20 = vsyncpa [#allocation5], 0
    // Predicated region
    $region2: #{tpu_custom_call.1} parent=1 // pred_check
      _
    $region3: #{tpu_custom_call.1} parent=1 // pred_check_branch
      %22 = sbr.rel (0) target = $region5
    $region4: #{tpu_custom_call.1} parent=1 // pred_region
      _
    $region5: #{tpu_custom_call.1} parent=1 // pred_fallthru
      _
    // Predicated region
    $region6: #{tpu_custom_call.1} parent=1 // pred_check
      _
    $region7: #{tpu_custom_call.1} parent=1 // pred_check_branch
      %24 = sbr.rel (0) target = $region9
    $region8: #{tpu_custom_call.1} parent=1 // pred_region
      _
    $region9: #{tpu_custom_call.1} parent=1 // pred_fallthru
      _
    // Predicated region
    $region10: #{tpu_custom_call.1} parent=1 // pred_check
      _
    $region11: #{tpu_custom_call.1} parent=1 // pred_check_branch
      %26 = sbr.rel (0) target = $region13
    $region12: #{tpu_custom_call.1} parent=1 // pred_region
      _
    $region13: #{tpu_custom_call.1} parent=1 // pred_fallthru
      _
    // Predicated region
    $region14: #{tpu_custom_call.1} parent=1 // pred_check
      _
    $region15: #{tpu_custom_call.1} parent=1 // pred_check_branch
      %28 = sbr.rel (0) target = $region17
    $region16: #{tpu_custom_call.1} parent=1 // pred_region
      _
    $region17: #{tpu_custom_call.1} parent=1 // pred_fallthru
      _
    // Predicated region
    $region18: #{tpu_custom_call.1} parent=1 // pred_check
      _
    $region19: #{tpu_custom_call.1} parent=1 // pred_check_branch
      %30 = sbr.rel (0) target = $region21
    $region20: #{tpu_custom_call.1} parent=1 // pred_region
      _
    $region21: #{tpu_custom_call.1} parent=1 // pred_fallthru
      _
    // Predicated region
    $region22: #{tpu_custom_call.1} parent=1 // pred_check
      _
    $region23: #{tpu_custom_call.1} parent=1 // pred_check_branch
      %32 = sbr.rel (0) target = $region25
    $region24: #{tpu_custom_call.1} parent=1 // pred_region
      _
    $region25: #{tpu_custom_call.1} parent=1 // pred_fallthru
      _
    // Predicated region
    $region26: #{tpu_custom_call.1} parent=1 // pred_check
      _
    $region27: #{tpu_custom_call.1} parent=1 // pred_check_branch
      %34 = sbr.rel (0) target = $region29
    $region28: #{tpu_custom_call.1} parent=1 // pred_region
      _
    $region29: #{tpu_custom_call.1} parent=1 // pred_fallthru
      _
    // Predicated region
    $region30: #{tpu_custom_call.1} parent=1 // pred_check
      _
    $region31: #{tpu_custom_call.1} parent=1 // pred_check_branch
      %36 = sbr.rel (0) target = $region33
    $region32: #{tpu_custom_call.1} parent=1 // pred_region
      _
    $region33: #{tpu_custom_call.1} parent=1 // pred_fallthru
      _
    // Predicated region
    $region34: #{tpu_custom_call.1} parent=1 // pred_check
      _
    $region35: #{tpu_custom_call.1} parent=1 // pred_check_branch
      %38 = sbr.rel (0) target = $region37
    $region36: #{tpu_custom_call.1} parent=1 // pred_region
      _
    $region37: #{tpu_custom_call.1} parent=1 // pred_fallthru
      _
    // Predicated region
    $region38: #{tpu_custom_call.1} parent=1 // pred_check
      _
    $region39: #{tpu_custom_call.1} parent=1 // pred_check_branch
      %40 = sbr.rel (0) target = $region41
    $region40: #{tpu_custom_call.1} parent=1 // pred_region
      _
    $region41: #{tpu_custom_call.1} parent=1 // pred_fallthru
      _
    // Predicated region
    $region42: #{tpu_custom_call.1} parent=1 // pred_check
      _
    $region43: #{tpu_custom_call.1} parent=1 // pred_check_branch
      %42 = sbr.rel (0) target = $region45
    $region44: #{tpu_custom_call.1} parent=1 // pred_region
      _
    $region45: #{tpu_custom_call.1} parent=1 // pred_fallthru
      _
    // Predicated region
    $region46: #{tpu_custom_call.1} parent=1 // pred_check
      _
    $region47: #{tpu_custom_call.1} parent=1 // pred_check_branch
      %44 = sbr.rel (0) target = $region49
    $region48: #{tpu_custom_call.1} parent=1 // pred_region
      _
    $region49: #{tpu_custom_call.1} parent=1 // pred_fallthru
      _
    // Predicated region
    $region50: #{tpu_custom_call.1} parent=1 // pred_check
      _
    $region51: #{tpu_custom_call.1} parent=1 // pred_check_branch
      %46 = sbr.rel (0) target = $region53
    $region52: #{tpu_custom_call.1} parent=1 // pred_region
      _
    $region53: #{tpu_custom_call.1} parent=1 // pred_fallthru
      _
    %v48 = vld [vmem:[%s2] sm:$0xff]
    %v49 = vld [vmem:[%s0] sm:$0xff]
    %v50 = vld [vmem:[%s0 + $0x8] sm:$0xff]
    %v51 = vld [vmem:[%s0 + $0x10] sm:$0xff]
    %v52 = vld [vmem:[%s0 + $0x18] sm:$0xff]
    %v53 = vld [vmem:[%s0 + $0x20] sm:$0xff]
    %v54 = vld [vmem:[%s0 + $0x28] sm:$0xff]
    %v55 = vld [vmem:[%s0 + $0x30] sm:$0xff]
    %v56 = vld [vmem:[%s0 + $0x38] sm:$0xff]
    %v57 = vpack.c.bf16 %v50, %v49
    %v58 = vpack.c.bf16 %v52, %v51
    %v59 = vpack.c.bf16 %v54, %v53
    %v60 = vpack.c.bf16 %v56, %v55
    %v61 = vld [vmem:[%s3] sm:$0xf]
    %v62 = vld [vmem:[%s5] sm:$0x1]
    %v64 = vperm.slane %v62, 0
    %vm66 = vcmask 64512
    %v68 = vsel %vm66, %v57, 0
    %v71 = vsel %vm66, %v58, 0
    %v74 = vsel %vm66, %v59, 0
    %v77 = vsel %vm66, %v60, 0
    %vm79 = vcmask 1043456
    %v81 = vsel %vm79, %v61, 0
    %83 = vmatpush.bf16.msra.mxu0 0
    %84 = vmatpush.bf16.msra.mxu0 0
    %85 = vmatpush.bf16.msra.mxu0 0
    %86 = vmatpush.bf16.msra.mxu0 0
    %87 = vmatpush.bf16.msra.mxu0 0
    %88 = vmatpush.bf16.msra.mxu0 0
    %89 = vmatpush.bf16.msra.mxu0 0
    %90 = vmatpush.bf16.msra.mxu0 %v81
    %91 = vmatmul.bf16.gmra.mxu0 %v68
    %v92 = vpop.f32.mrf.mxu0
    %v93 = vadd.f32 %v64, %v92
    %v94 = vpop.f32.mrf.mxu0
    %v95 = vadd.f32 %v64, %v94
    %96 = vmatmul.bf16.gmra.mxu0 %v71
    %v97 = vpop.f32.mrf.mxu0
    %v98 = vadd.f32 %v64, %v97
    %v99 = vpop.f32.mrf.mxu0
    %v100 = vadd.f32 %v64, %v99
    %101 = vmatmul.bf16.gmra.mxu0 %v74
    %v102 = vpop.f32.mrf.mxu0
    %v103 = vadd.f32 %v64, %v102
    %v104 = vpop.f32.mrf.mxu0
    %v105 = vadd.f32 %v64, %v104
    %106 = vmatmul.bf16.gmra.mxu0 %v77
    %v107 = vpop.f32.mrf.mxu0
    %v108 = vadd.f32 %v64, %v107
    %v109 = vpop.f32.mrf.mxu0
    %v110 = vadd.f32 %v64, %v109
    %111 = vdwg.mxu0
    %112 = vst [vmem:[#allocation3] sm:$0xff] %v93
    %113 = vst [vmem:[#allocation3 + $0x8] sm:$0xff] %v95
    %114 = vst [vmem:[#allocation3 + $0x10] sm:$0xff] %v98
    %115 = vst [vmem:[#allocation3 + $0x18] sm:$0xff] %v100
    %116 = vst [vmem:[#allocation3 + $0x20] sm:$0xff] %v103
    %117 = vst [vmem:[#allocation3 + $0x28] sm:$0xff] %v105
    %118 = vst [vmem:[#allocation3 + $0x30] sm:$0xff] %v108
    %119 = vst [vmem:[#allocation3 + $0x38] sm:$0xff] %v110
    %v120 = vld [vmem:[%s4] sm:$0xf]
    %v121 = vld [vmem:[%s4 + $0x4] sm:$0xf]
    %v122 = vld [vmem:[%s4 + $0x8] sm:$0xf]
    %v123 = vld [vmem:[%s4 + $0xc] sm:$0xf]
    %v124 = vld [vmem:[%s6] sm:$0x1]
    %v125 = vld [vmem:[%s1] sm:$0xff]
    %v126 = vld [vmem:[#allocation3] sm:$0xff]
    %v127 = vpack.c.bf16 %v125, %v125
    %v129 = vperm.slane %v124, 0
    %v135 = vunpack.c.l.b16 %v120
    %v136 = vunpack.c.l.b16 %v121
    %v137 = vunpack.c.l.b16 %v122
    %v138 = vunpack.c.l.b16 %v123
    %v139 = vpack.c.b16 %v136, %v135
    %v140 = vpack.c.b16 %v138, %v137
    %vm143 = vcmask 261120
    %v145 = vsel %vm143, %v127, 0
    %147 = vmatpush.bf16.msra.mxu0 0
    %148 = vmatpush.bf16.msra.mxu0 0
    %149 = vmatpush.bf16.msra.mxu0 0
    %150 = vmatpush.bf16.msra.mxu0 0
    %151 = vmatpush.bf16.msra.mxu0 0
    %152 = vmatpush.bf16.msra.mxu0 0
    %153 = vmatpush.bf16.msra.mxu0 %v140
    %154 = vmatpush.bf16.msra.mxu0 %v139
    %155 = vmatmul.bf16.gmra.mxu0 %v145
    %v156 = vpop.f32.mrf.mxu0
    %v157 = vadd.f32 %v129, %v156
    %v158 = vpop.f32.mrf.mxu0
    %159 = vdwg.mxu0
    %v160 = vadd.f32 %v126, %v157
    %v161 = vxor.u32 %v160, 2147483648
    %v162 = vmul.f32 %v161, 1.442695
    %v163 = vpow.pop %v162
    %v164 = vadd.f32 %v163, 1.0
    %v165 = vrcp.pop %v164
    %v166 = vmul.f32 %v164, %v165
    %v167 = vsub.f32 1.0, %v166
    %v168 = vmul.f32 %v165, %v167
    %v169 = vadd.f32 %v165, %v168
    %vm170 = vweird.f32 %v164
    %vm171 = vweird.f32 %v165
    %vm172 = vmor %vm170, %vm171
    %v173 = vsel %vm172, %v165, %v169
    %v174 = vand.u32 2147483647, %v164
    %vm175 = vcmp.eq.f32.partialorder %v174, 8.507059e+37
    %v176 = vand.u32 %v164, 2147483648
    %v177 = vor.u32 1.1754944e-38, %v176
    %v178 = vsel %vm175, %v177, %v173
    %v179 = vmul.f32 1.0, %v178
    %181 = vrot.lane.b32.xlu0 %v157, 64
    %v182 = vpop.permute.xlu0 %181
    %v184 = vmul.f32 %v179, %v182
    %186 = vrot.lane.b32.xlu0 %v184, 64
    %v187 = vpop.permute.xlu0 %186
    %v189 = vadd.f32 %v126, %v187
    %v190 = vtanh.pop %v189
    %192 = vrot.lane.b32.xlu0 %v190, 64
    %v193 = vpop.permute.xlu0 %192
    %v195 = vsub.f32 %v125, %v193
    %197 = vrot.lane.b32.xlu0 %v195, 32
    %v198 = vpop.permute.xlu0 %197
    %v200 = vmul.f32 %v179, %v198
    %202 = vrot.lane.b32.xlu0 %v200, 32
    %v203 = vpop.permute.xlu0 %202
    %v205 = vadd.f32 %v190, %v203
    %vm206 = vcmp.gt.s32.totalorder %v48, 0
    %v207 = vsel %vm206, 1, 0
    %v208 = vcvt.s32.f32 %v207
    %210 = vset.pattern.permute.xlu0 0
    %211 = vperm.xlu0 %210, %v208
    %v212 = vpop.permute.xlu0 %211
    %v214 = vmul.f32 %v212, %v205
    %216 = vrot.lane.b32.xlu0 %v214, 64
    %v217 = vpop.permute.xlu0 %216
    %219 = vst.msk [vmem:[#allocation2] sm:$0xff] %vm143, %v217
    %221 = vrot.lane.b32.xlu0 %v125, 64
    %v222 = vpop.permute.xlu0 %221
    %v224 = vsub.f32 %v205, %v222
    %v225 = vmul.f32 %v212, %v224
    %227 = vrot.lane.b32.xlu0 %v225, 64
    %v228 = vpop.permute.xlu0 %227
    %v230 = vadd.f32 %v125, %v228
    %s231 = scalar_lea.vmem [#allocation3], 8
    %v232 = vld [vmem:[%s231] sm:$0xff]
    %v233 = vpack.c.bf16 %v230, %v230
    %v235 = vsel %vm143, %v233, 0
    %237 = vmatpush.bf16.msra.mxu0 0
    %238 = vmatpush.bf16.msra.mxu0 0
    %239 = vmatpush.bf16.msra.mxu0 0
    %240 = vmatpush.bf16.msra.mxu0 0
    %241 = vmatpush.bf16.msra.mxu0 0
    %242 = vmatpush.bf16.msra.mxu0 0
    %243 = vmatpush.bf16.msra.mxu0 %v140
    %244 = vmatpush.bf16.msra.mxu0 %v139
    %245 = vmatmul.bf16.gmra.mxu0 %v235
    %v246 = vpop.f32.mrf.mxu0
    %v247 = vadd.f32 %v129, %v246
    %v248 = vpop.f32.mrf.mxu0
    %249 = vdwg.mxu0
    %v250 = vadd.f32 %v232, %v247
    %v251 = vxor.u32 %v250, 2147483648
    %v252 = vmul.f32 %v251, 1.442695
    %v253 = vpow.pop %v252
    %v254 = vadd.f32 %v253, 1.0
    %v255 = vrcp.pop %v254
    %v256 = vmul.f32 %v254, %v255
    %v257 = vsub.f32 1.0, %v256
    %v258 = vmul.f32 %v255, %v257
    %v259 = vadd.f32 %v255, %v258
    %vm260 = vweird.f32 %v254
    %vm261 = vweird.f32 %v255
    %vm262 = vmor %vm260, %vm261
    %v263 = vsel %vm262, %v255, %v259
    %v264 = vand.u32 2147483647, %v254
    %vm265 = vcmp.eq.f32.partialorder %v264, 8.507059e+37
    %v266 = vand.u32 %v254, 2147483648
    %v267 = vor.u32 1.1754944e-38, %v266
    %v268 = vsel %vm265, %v267, %v263
    %v269 = vmul.f32 1.0, %v268
    %271 = vrot.lane.b32.xlu0 %v247, 64
    %v272 = vpop.permute.xlu0 %271
    %v274 = vmul.f32 %v269, %v272
    %276 = vrot.lane.b32.xlu0 %v274, 64
    %v277 = vpop.permute.xlu0 %276
    %v279 = vadd.f32 %v232, %v277
    %v280 = vtanh.pop %v279
    %282 = vrot.lane.b32.xlu0 %v280, 64
    %v283 = vpop.permute.xlu0 %282
    %v285 = vsub.f32 %v230, %v283
    %287 = vrot.lane.b32.xlu0 %v285, 32
    %v288 = vpop.permute.xlu0 %287
    %v290 = vmul.f32 %v269, %v288
    %292 = vrot.lane.b32.xlu0 %v290, 32
    %v293 = vpop.permute.xlu0 %292
    %v295 = vadd.f32 %v280, %v293
    %vm296 = vcmp.gt.s32.totalorder %v48, 1
    %v297 = vsel %vm296, 1, 0
    %v298 = vcvt.s32.f32 %v297
    %300 = vset.pattern.permute.xlu0 0
    %301 = vperm.xlu0 %300, %v298
    %v302 = vpop.permute.xlu0 %301
    %v304 = vmul.f32 %v302, %v295
    %306 = vrot.lane.b32.xlu0 %v304, 64
    %v307 = vpop.permute.xlu0 %306
    %s309 = scalar_lea.vmem [#allocation2], 8
    %310 = vst.msk [vmem:[%s309] sm:$0xff] %vm143, %v307
    %312 = vrot.lane.b32.xlu0 %v230, 64
    %v313 = vpop.permute.xlu0 %312
    %v315 = vsub.f32 %v295, %v313
    %v316 = vmul.f32 %v302, %v315
    %318 = vrot.lane.b32.xlu0 %v316, 64
    %v319 = vpop.permute.xlu0 %318
    %v321 = vadd.f32 %v230, %v319
    %s322 = scalar_lea.vmem [#allocation3], 16
    %v323 = vld [vmem:[%s322] sm:$0xff]
    %v324 = vpack.c.bf16 %v321, %v321
    %v326 = vsel %vm143, %v324, 0
    %328 = vmatpush.bf16.msra.mxu0 0
    %329 = vmatpush.bf16.msra.mxu0 0
    %330 = vmatpush.bf16.msra.mxu0 0
    %331 = vmatpush.bf16.msra.mxu0 0
    %332 = vmatpush.bf16.msra.mxu0 0
    %333 = vmatpush.bf16.msra.mxu0 0
    %334 = vmatpush.bf16.msra.mxu0 %v140
    %335 = vmatpush.bf16.msra.mxu0 %v139
    %336 = vmatmul.bf16.gmra.mxu0 %v326
    %v337 = vpop.f32.mrf.mxu0
    %v338 = vadd.f32 %v129, %v337
    %v339 = vpop.f32.mrf.mxu0
    %340 = vdwg.mxu0
    %v341 = vadd.f32 %v323, %v338
    %v342 = vxor.u32 %v341, 2147483648
    %v343 = vmul.f32 %v342, 1.442695
    %v344 = vpow.pop %v343
    %v345 = vadd.f32 %v344, 1.0
    %v346 = vrcp.pop %v345
    %v347 = vmul.f32 %v345, %v346
    %v348 = vsub.f32 1.0, %v347
    %v349 = vmul.f32 %v346, %v348
    %v350 = vadd.f32 %v346, %v349
    %vm351 = vweird.f32 %v345
    %vm352 = vweird.f32 %v346
    %vm353 = vmor %vm351, %vm352
    %v354 = vsel %vm353, %v346, %v350
    %v355 = vand.u32 2147483647, %v345
    %vm356 = vcmp.eq.f32.partialorder %v355, 8.507059e+37
    %v357 = vand.u32 %v345, 2147483648
    %v358 = vor.u32 1.1754944e-38, %v357
    %v359 = vsel %vm356, %v358, %v354
    %v360 = vmul.f32 1.0, %v359
    %362 = vrot.lane.b32.xlu0 %v338, 64
    %v363 = vpop.permute.xlu0 %362
    %v365 = vmul.f32 %v360, %v363
    %367 = vrot.lane.b32.xlu0 %v365, 64
    %v368 = vpop.permute.xlu0 %367
    %v370 = vadd.f32 %v323, %v368
    %v371 = vtanh.pop %v370
    %373 = vrot.lane.b32.xlu0 %v371, 64
    %v374 = vpop.permute.xlu0 %373
    %v376 = vsub.f32 %v321, %v374
    %378 = vrot.lane.b32.xlu0 %v376, 32
    %v379 = vpop.permute.xlu0 %378
    %v381 = vmul.f32 %v360, %v379
    %383 = vrot.lane.b32.xlu0 %v381, 32
    %v384 = vpop.permute.xlu0 %383
    %v386 = vadd.f32 %v371, %v384
    %vm387 = vcmp.gt.s32.totalorder %v48, 2
    %v388 = vsel %vm387, 1, 0
    %v389 = vcvt.s32.f32 %v388
    %391 = vset.pattern.permute.xlu0 0
    %392 = vperm.xlu0 %391, %v389
    %v393 = vpop.permute.xlu0 %392
    %v395 = vmul.f32 %v393, %v386
    %397 = vrot.lane.b32.xlu0 %v395, 64
    %v398 = vpop.permute.xlu0 %397
    %s400 = scalar_lea.vmem [#allocation2], 16
    %401 = vst.msk [vmem:[%s400] sm:$0xff] %vm143, %v398
    %403 = vrot.lane.b32.xlu0 %v321, 64
    %v404 = vpop.permute.xlu0 %403
    %v406 = vsub.f32 %v386, %v404
    %v407 = vmul.f32 %v393, %v406
    %409 = vrot.lane.b32.xlu0 %v407, 64
    %v410 = vpop.permute.xlu0 %409
    %v412 = vadd.f32 %v321, %v410
    %s413 = scalar_lea.vmem [#allocation3], 24
    %v414 = vld [vmem:[%s413] sm:$0xff]
    %v415 = vpack.c.bf16 %v412, %v412
    %v417 = vsel %vm143, %v415, 0
    %419 = vmatpush.bf16.msra.mxu0 0
    %420 = vmatpush.bf16.msra.mxu0 0
    %421 = vmatpush.bf16.msra.mxu0 0
    %422 = vmatpush.bf16.msra.mxu0 0
    %423 = vmatpush.bf16.msra.mxu0 0
    %424 = vmatpush.bf16.msra.mxu0 0
    %425 = vmatpush.bf16.msra.mxu0 %v140
    %426 = vmatpush.bf16.msra.mxu0 %v139
    %427 = vmatmul.bf16.gmra.mxu0 %v417
    %v428 = vpop.f32.mrf.mxu0
    %v429 = vadd.f32 %v129, %v428
    %v430 = vpop.f32.mrf.mxu0
    %431 = vdwg.mxu0
    %v432 = vadd.f32 %v414, %v429
    %v433 = vxor.u32 %v432, 2147483648
    %v434 = vmul.f32 %v433, 1.442695
    %v435 = vpow.pop %v434
    %v436 = vadd.f32 %v435, 1.0
    %v437 = vrcp.pop %v436
    %v438 = vmul.f32 %v436, %v437
    %v439 = vsub.f32 1.0, %v438
    %v440 = vmul.f32 %v437, %v439
    %v441 = vadd.f32 %v437, %v440
    %vm442 = vweird.f32 %v436
    %vm443 = vweird.f32 %v437
    %vm444 = vmor %vm442, %vm443
    %v445 = vsel %vm444, %v437, %v441
    %v446 = vand.u32 2147483647, %v436
    %vm447 = vcmp.eq.f32.partialorder %v446, 8.507059e+37
    %v448 = vand.u32 %v436, 2147483648
    %v449 = vor.u32 1.1754944e-38, %v448
    %v450 = vsel %vm447, %v449, %v445
    %v451 = vmul.f32 1.0, %v450
    %453 = vrot.lane.b32.xlu0 %v429, 64
    %v454 = vpop.permute.xlu0 %453
    %v456 = vmul.f32 %v451, %v454
    %458 = vrot.lane.b32.xlu0 %v456, 64
    %v459 = vpop.permute.xlu0 %458
    %v461 = vadd.f32 %v414, %v459
    %v462 = vtanh.pop %v461
    %464 = vrot.lane.b32.xlu0 %v462, 64
    %v465 = vpop.permute.xlu0 %464
    %v467 = vsub.f32 %v412, %v465
    %469 = vrot.lane.b32.xlu0 %v467, 32
    %v470 = vpop.permute.xlu0 %469
    %v472 = vmul.f32 %v451, %v470
    %474 = vrot.lane.b32.xlu0 %v472, 32
    %v475 = vpop.permute.xlu0 %474
    %v477 = vadd.f32 %v462, %v475
    %vm478 = vcmp.gt.s32.totalorder %v48, 3
    %v479 = vsel %vm478, 1, 0
    %v480 = vcvt.s32.f32 %v479
    %482 = vset.pattern.permute.xlu0 0
    %483 = vperm.xlu0 %482, %v480
    %v484 = vpop.permute.xlu0 %483
    %v486 = vmul.f32 %v484, %v477
    %488 = vrot.lane.b32.xlu0 %v486, 64
    %v489 = vpop.permute.xlu0 %488
    %s491 = scalar_lea.vmem [#allocation2], 24
    %492 = vst.msk [vmem:[%s491] sm:$0xff] %vm143, %v489
    %494 = vrot.lane.b32.xlu0 %v412, 64
    %v495 = vpop.permute.xlu0 %494
    %v497 = vsub.f32 %v477, %v495
    %v498 = vmul.f32 %v484, %v497
    %500 = vrot.lane.b32.xlu0 %v498, 64
    %v501 = vpop.permute.xlu0 %500
    %v503 = vadd.f32 %v412, %v501
    %s504 = scalar_lea.vmem [#allocation3], 32
    %v505 = vld [vmem:[%s504] sm:$0xff]
    %v506 = vpack.c.bf16 %v503, %v503
    %v508 = vsel %vm143, %v506, 0
    %510 = vmatpush.bf16.msra.mxu0 0
    %511 = vmatpush.bf16.msra.mxu0 0
    %512 = vmatpush.bf16.msra.mxu0 0
    %513 = vmatpush.bf16.msra.mxu0 0
    %514 = vmatpush.bf16.msra.mxu0 0
    %515 = vmatpush.bf16.msra.mxu0 0
    %516 = vmatpush.bf16.msra.mxu0 %v140
    %517 = vmatpush.bf16.msra.mxu0 %v139
    %518 = vmatmul.bf16.gmra.mxu0 %v508
    %v519 = vpop.f32.mrf.mxu0
    %v520 = vadd.f32 %v129, %v519
    %v521 = vpop.f32.mrf.mxu0
    %522 = vdwg.mxu0
    %v523 = vadd.f32 %v505, %v520
    %v524 = vxor.u32 %v523, 2147483648
    %v525 = vmul.f32 %v524, 1.442695
    %v526 = vpow.pop %v525
    %v527 = vadd.f32 %v526, 1.0
    %v528 = vrcp.pop %v527
    %v529 = vmul.f32 %v527, %v528
    %v530 = vsub.f32 1.0, %v529
    %v531 = vmul.f32 %v528, %v530
    %v532 = vadd.f32 %v528, %v531
    %vm533 = vweird.f32 %v527
    %vm534 = vweird.f32 %v528
    %vm535 = vmor %vm533, %vm534
    %v536 = vsel %vm535, %v528, %v532
    %v537 = vand.u32 2147483647, %v527
    %vm538 = vcmp.eq.f32.partialorder %v537, 8.507059e+37
    %v539 = vand.u32 %v527, 2147483648
    %v540 = vor.u32 1.1754944e-38, %v539
    %v541 = vsel %vm538, %v540, %v536
    %v542 = vmul.f32 1.0, %v541
    %544 = vrot.lane.b32.xlu0 %v520, 64
    %v545 = vpop.permute.xlu0 %544
    %v547 = vmul.f32 %v542, %v545
    %549 = vrot.lane.b32.xlu0 %v547, 64
    %v550 = vpop.permute.xlu0 %549
    %v552 = vadd.f32 %v505, %v550
    %v553 = vtanh.pop %v552
    %555 = vrot.lane.b32.xlu0 %v553, 64
    %v556 = vpop.permute.xlu0 %555
    %v558 = vsub.f32 %v503, %v556
    %560 = vrot.lane.b32.xlu0 %v558, 32
    %v561 = vpop.permute.xlu0 %560
    %v563 = vmul.f32 %v542, %v561
    %565 = vrot.lane.b32.xlu0 %v563, 32
    %v566 = vpop.permute.xlu0 %565
    %v568 = vadd.f32 %v553, %v566
    %vm569 = vcmp.gt.s32.totalorder %v48, 4
    %v570 = vsel %vm569, 1, 0
    %v571 = vcvt.s32.f32 %v570
    %573 = vset.pattern.permute.xlu0 0
    %574 = vperm.xlu0 %573, %v571
    %v575 = vpop.permute.xlu0 %574
    %v577 = vmul.f32 %v575, %v568
    %579 = vrot.lane.b32.xlu0 %v577, 64
    %v580 = vpop.permute.xlu0 %579
    %s582 = scalar_lea.vmem [#allocation2], 32
    %583 = vst.msk [vmem:[%s582] sm:$0xff] %vm143, %v580
    %585 = vrot.lane.b32.xlu0 %v503, 64
    %v586 = vpop.permute.xlu0 %585
    %v588 = vsub.f32 %v568, %v586
    %v589 = vmul.f32 %v575, %v588
    %591 = vrot.lane.b32.xlu0 %v589, 64
    %v592 = vpop.permute.xlu0 %591
    %v594 = vadd.f32 %v503, %v592
    %s595 = scalar_lea.vmem [#allocation3], 40
    %v596 = vld [vmem:[%s595] sm:$0xff]
    %v597 = vpack.c.bf16 %v594, %v594
    %v599 = vsel %vm143, %v597, 0
    %601 = vmatpush.bf16.msra.mxu0 0
    %602 = vmatpush.bf16.msra.mxu0 0
    %603 = vmatpush.bf16.msra.mxu0 0
    %604 = vmatpush.bf16.msra.mxu0 0
    %605 = vmatpush.bf16.msra.mxu0 0
    %606 = vmatpush.bf16.msra.mxu0 0
    %607 = vmatpush.bf16.msra.mxu0 %v140
    %608 = vmatpush.bf16.msra.mxu0 %v139
    %609 = vmatmul.bf16.gmra.mxu0 %v599
    %v610 = vpop.f32.mrf.mxu0
    %v611 = vadd.f32 %v129, %v610
    %v612 = vpop.f32.mrf.mxu0
    %613 = vdwg.mxu0
    %v614 = vadd.f32 %v596, %v611
    %v615 = vxor.u32 %v614, 2147483648
    %v616 = vmul.f32 %v615, 1.442695
    %v617 = vpow.pop %v616
    %v618 = vadd.f32 %v617, 1.0
    %v619 = vrcp.pop %v618
    %v620 = vmul.f32 %v618, %v619
    %v621 = vsub.f32 1.0, %v620
    %v622 = vmul.f32 %v619, %v621
    %v623 = vadd.f32 %v619, %v622
    %vm624 = vweird.f32 %v618
    %vm625 = vweird.f32 %v619
    %vm626 = vmor %vm624, %vm625
    %v627 = vsel %vm626, %v619, %v623
    %v628 = vand.u32 2147483647, %v618
    %vm629 = vcmp.eq.f32.partialorder %v628, 8.507059e+37
    %v630 = vand.u32 %v618, 2147483648
    %v631 = vor.u32 1.1754944e-38, %v630
    %v632 = vsel %vm629, %v631, %v627
    %v633 = vmul.f32 1.0, %v632
    %635 = vrot.lane.b32.xlu0 %v611, 64
    %v636 = vpop.permute.xlu0 %635
    %v638 = vmul.f32 %v633, %v636
    %640 = vrot.lane.b32.xlu0 %v638, 64
    %v641 = vpop.permute.xlu0 %640
    %v643 = vadd.f32 %v596, %v641
    %v644 = vtanh.pop %v643
    %646 = vrot.lane.b32.xlu0 %v644, 64
    %v647 = vpop.permute.xlu0 %646
    %v649 = vsub.f32 %v594, %v647
    %651 = vrot.lane.b32.xlu0 %v649, 32
    %v652 = vpop.permute.xlu0 %651
    %v654 = vmul.f32 %v633, %v652
    %656 = vrot.lane.b32.xlu0 %v654, 32
    %v657 = vpop.permute.xlu0 %656
    %v659 = vadd.f32 %v644, %v657
    %vm660 = vcmp.gt.s32.totalorder %v48, 5
    %v661 = vsel %vm660, 1, 0
    %v662 = vcvt.s32.f32 %v661
    %664 = vset.pattern.permute.xlu0 0
    %665 = vperm.xlu0 %664, %v662
    %v666 = vpop.permute.xlu0 %665
    %v668 = vmul.f32 %v666, %v659
    %670 = vrot.lane.b32.xlu0 %v668, 64
    %v671 = vpop.permute.xlu0 %670
    %s673 = scalar_lea.vmem [#allocation2], 40
    %674 = vst.msk [vmem:[%s673] sm:$0xff] %vm143, %v671
    %676 = vrot.lane.b32.xlu0 %v594, 64
    %v677 = vpop.permute.xlu0 %676
    %v679 = vsub.f32 %v659, %v677
    %v680 = vmul.f32 %v666, %v679
    %682 = vrot.lane.b32.xlu0 %v680, 64
    %v683 = vpop.permute.xlu0 %682
    %v685 = vadd.f32 %v594, %v683
    %s686 = scalar_lea.vmem [#allocation3], 48
    %v687 = vld [vmem:[%s686] sm:$0xff]
    %v688 = vpack.c.bf16 %v685, %v685
    %v690 = vsel %vm143, %v688, 0
    %692 = vmatpush.bf16.msra.mxu0 0
    %693 = vmatpush.bf16.msra.mxu0 0
    %694 = vmatpush.bf16.msra.mxu0 0
    %695 = vmatpush.bf16.msra.mxu0 0
    %696 = vmatpush.bf16.msra.mxu0 0
    %697 = vmatpush.bf16.msra.mxu0 0
    %698 = vmatpush.bf16.msra.mxu0 %v140
    %699 = vmatpush.bf16.msra.mxu0 %v139
    %700 = vmatmul.bf16.gmra.mxu0 %v690
    %v701 = vpop.f32.mrf.mxu0
    %v702 = vadd.f32 %v129, %v701
    %v703 = vpop.f32.mrf.mxu0
    %704 = vdwg.mxu0
    %v705 = vadd.f32 %v687, %v702
    %v706 = vxor.u32 %v705, 2147483648
    %v707 = vmul.f32 %v706, 1.442695
    %v708 = vpow.pop %v707
    %v709 = vadd.f32 %v708, 1.0
    %v710 = vrcp.pop %v709
    %v711 = vmul.f32 %v709, %v710
    %v712 = vsub.f32 1.0, %v711
    %v713 = vmul.f32 %v710, %v712
    %v714 = vadd.f32 %v710, %v713
    %vm715 = vweird.f32 %v709
    %vm716 = vweird.f32 %v710
    %vm717 = vmor %vm715, %vm716
    %v718 = vsel %vm717, %v710, %v714
    %v719 = vand.u32 2147483647, %v709
    %vm720 = vcmp.eq.f32.partialorder %v719, 8.507059e+37
    %v721 = vand.u32 %v709, 2147483648
    %v722 = vor.u32 1.1754944e-38, %v721
    %v723 = vsel %vm720, %v722, %v718
    %v724 = vmul.f32 1.0, %v723
    %726 = vrot.lane.b32.xlu0 %v702, 64
    %v727 = vpop.permute.xlu0 %726
    %v729 = vmul.f32 %v724, %v727
    %731 = vrot.lane.b32.xlu0 %v729, 64
    %v732 = vpop.permute.xlu0 %731
    %v734 = vadd.f32 %v687, %v732
    %v735 = vtanh.pop %v734
    %737 = vrot.lane.b32.xlu0 %v735, 64
    %v738 = vpop.permute.xlu0 %737
    %v740 = vsub.f32 %v685, %v738
    %742 = vrot.lane.b32.xlu0 %v740, 32
    %v743 = vpop.permute.xlu0 %742
    %v745 = vmul.f32 %v724, %v743
    %747 = vrot.lane.b32.xlu0 %v745, 32
    %v748 = vpop.permute.xlu0 %747
    %v750 = vadd.f32 %v735, %v748
    %vm751 = vcmp.gt.s32.totalorder %v48, 6
    %v752 = vsel %vm751, 1, 0
    %v753 = vcvt.s32.f32 %v752
    %755 = vset.pattern.permute.xlu0 0
    %756 = vperm.xlu0 %755, %v753
    %v757 = vpop.permute.xlu0 %756
    %v759 = vmul.f32 %v757, %v750
    %761 = vrot.lane.b32.xlu0 %v759, 64
    %v762 = vpop.permute.xlu0 %761
    %s764 = scalar_lea.vmem [#allocation2], 48
    %765 = vst.msk [vmem:[%s764] sm:$0xff] %vm143, %v762
    %767 = vrot.lane.b32.xlu0 %v685, 64
    %v768 = vpop.permute.xlu0 %767
    %v770 = vsub.f32 %v750, %v768
    %v771 = vmul.f32 %v757, %v770
    %773 = vrot.lane.b32.xlu0 %v771, 64
    %v774 = vpop.permute.xlu0 %773
    %v776 = vadd.f32 %v685, %v774
    %s777 = scalar_lea.vmem [#allocation3], 56
    %v778 = vld [vmem:[%s777] sm:$0xff]
    %v779 = vpack.c.bf16 %v776, %v776
    %v781 = vsel %vm143, %v779, 0
    %783 = vmatpush.bf16.msra.mxu0 0
    %784 = vmatpush.bf16.msra.mxu0 0
    %785 = vmatpush.bf16.msra.mxu0 0
    %786 = vmatpush.bf16.msra.mxu0 0
    %787 = vmatpush.bf16.msra.mxu0 0
    %788 = vmatpush.bf16.msra.mxu0 0
    %789 = vmatpush.bf16.msra.mxu0 %v140
    %790 = vmatpush.bf16.msra.mxu0 %v139
    %791 = vmatmul.bf16.gmra.mxu0 %v781
    %v792 = vpop.f32.mrf.mxu0
    %v793 = vadd.f32 %v129, %v792
    %v794 = vpop.f32.mrf.mxu0
    %795 = vdwg.mxu0
    %v796 = vadd.f32 %v778, %v793
    %v797 = vxor.u32 %v796, 2147483648
    %v798 = vmul.f32 %v797, 1.442695
    %v799 = vpow.pop %v798
    %v800 = vadd.f32 %v799, 1.0
    %v801 = vrcp.pop %v800
    %v802 = vmul.f32 %v800, %v801
    %v803 = vsub.f32 1.0, %v802
    %v804 = vmul.f32 %v801, %v803
    %v805 = vadd.f32 %v801, %v804
    %vm806 = vweird.f32 %v800
    %vm807 = vweird.f32 %v801
    %vm808 = vmor %vm806, %vm807
    %v809 = vsel %vm808, %v801, %v805
    %v810 = vand.u32 2147483647, %v800
    %vm811 = vcmp.eq.f32.partialorder %v810, 8.507059e+37
    %v812 = vand.u32 %v800, 2147483648
    %v813 = vor.u32 1.1754944e-38, %v812
    %v814 = vsel %vm811, %v813, %v809
    %v815 = vmul.f32 1.0, %v814
    %817 = vrot.lane.b32.xlu0 %v793, 64
    %v818 = vpop.permute.xlu0 %817
    %v820 = vmul.f32 %v815, %v818
    %822 = vrot.lane.b32.xlu0 %v820, 64
    %v823 = vpop.permute.xlu0 %822
    %v825 = vadd.f32 %v778, %v823
    %v826 = vtanh.pop %v825
    %828 = vrot.lane.b32.xlu0 %v826, 64
    %v829 = vpop.permute.xlu0 %828
    %v831 = vsub.f32 %v776, %v829
    %833 = vrot.lane.b32.xlu0 %v831, 32
    %v834 = vpop.permute.xlu0 %833
    %v836 = vmul.f32 %v815, %v834
    %838 = vrot.lane.b32.xlu0 %v836, 32
    %v839 = vpop.permute.xlu0 %838
    %v841 = vadd.f32 %v826, %v839
    %vm842 = vcmp.gt.s32.totalorder %v48, 7
    %v843 = vsel %vm842, 1, 0
    %v844 = vcvt.s32.f32 %v843
    %846 = vset.pattern.permute.xlu0 0
    %847 = vperm.xlu0 %846, %v844
    %v848 = vpop.permute.xlu0 %847
    %v850 = vmul.f32 %v848, %v841
    %852 = vrot.lane.b32.xlu0 %v850, 64
    %v853 = vpop.permute.xlu0 %852
    %s855 = scalar_lea.vmem [#allocation2], 56
    %856 = vst.msk [vmem:[%s855] sm:$0xff] %vm143, %v853
    %858 = vrot.lane.b32.xlu0 %v776, 64
    %v859 = vpop.permute.xlu0 %858
    %v861 = vsub.f32 %v841, %v859
    %v862 = vmul.f32 %v848, %v861
    %864 = vrot.lane.b32.xlu0 %v862, 64
    %v865 = vpop.permute.xlu0 %864
    %v867 = vadd.f32 %v776, %v865
    %868 = vst.msk [vmem:[#allocation4] sm:$0xff] %vm143, %v867
    %v869 = vld [vmem:[#allocation2] sm:$0xff]
    %v870 = vld [vmem:[#allocation2 + $0x8] sm:$0xff]
    %v871 = vld [vmem:[#allocation2 + $0x10] sm:$0xff]
    %v872 = vld [vmem:[#allocation2 + $0x18] sm:$0xff]
    %v873 = vld [vmem:[#allocation2 + $0x20] sm:$0xff]
    %v874 = vld [vmem:[#allocation2 + $0x28] sm:$0xff]
    %v875 = vld [vmem:[#allocation2 + $0x30] sm:$0xff]
    %v876 = vld [vmem:[#allocation2 + $0x38] sm:$0xff]
    %v877 = vpack.c.bf16 %v870, %v869
    %v878 = vpack.c.bf16 %v872, %v871
    %v879 = vpack.c.bf16 %v874, %v873
    %v880 = vpack.c.bf16 %v876, %v875
    %v881 = vld [vmem:[%s7] sm:$0xf]
    %v882 = vld [vmem:[%s7 + $0x4] sm:$0xf]
    %v883 = vld [vmem:[%s7 + $0x8] sm:$0xf]
    %v884 = vld [vmem:[%s7 + $0xc] sm:$0xf]
    %v885 = vld [vmem:[%s9] sm:$0x1]
    %v887 = vperm.slane %v885, 0
    %v893 = vunpack.c.l.b16 %v881
    %v894 = vunpack.c.l.b16 %v882
    %v895 = vunpack.c.l.b16 %v883
    %v896 = vunpack.c.l.b16 %v884
    %v897 = vpack.c.b16 %v894, %v893
    %v898 = vpack.c.b16 %v896, %v895
    %v902 = vsel %vm143, %v877, 0
    %v905 = vsel %vm143, %v878, 0
    %v908 = vsel %vm143, %v879, 0
    %v911 = vsel %vm143, %v880, 0
    %913 = vmatpush.bf16.msra.mxu0 0
    %914 = vmatpush.bf16.msra.mxu0 0
    %915 = vmatpush.bf16.msra.mxu0 0
    %916 = vmatpush.bf16.msra.mxu0 0
    %917 = vmatpush.bf16.msra.mxu0 0
    %918 = vmatpush.bf16.msra.mxu0 0
    %919 = vmatpush.bf16.msra.mxu0 %v898
    %920 = vmatpush.bf16.msra.mxu0 %v897
    %921 = vmatmul.bf16.gmra.mxu0 %v902
    %v922 = vpop.f32.mrf.mxu0
    %v923 = vadd.f32 %v887, %v922
    %v924 = vpop.f32.mrf.mxu0
    %v925 = vadd.f32 %v887, %v924
    %926 = vmatmul.bf16.gmra.mxu0 %v905
    %v927 = vpop.f32.mrf.mxu0
    %v928 = vadd.f32 %v887, %v927
    %v929 = vpop.f32.mrf.mxu0
    %v930 = vadd.f32 %v887, %v929
    %931 = vmatmul.bf16.gmra.mxu0 %v908
    %v932 = vpop.f32.mrf.mxu0
    %v933 = vadd.f32 %v887, %v932
    %v934 = vpop.f32.mrf.mxu0
    %v935 = vadd.f32 %v887, %v934
    %936 = vmatmul.bf16.gmra.mxu0 %v911
    %v937 = vpop.f32.mrf.mxu0
    %v938 = vadd.f32 %v887, %v937
    %v939 = vpop.f32.mrf.mxu0
    %v940 = vadd.f32 %v887, %v939
    %941 = vdwg.mxu0
    %942 = vst [vmem:[#allocation3] sm:$0xff] %v923
    %943 = vst [vmem:[#allocation3 + $0x8] sm:$0xff] %v925
    %944 = vst [vmem:[#allocation3 + $0x10] sm:$0xff] %v928
    %945 = vst [vmem:[#allocation3 + $0x18] sm:$0xff] %v930
    %946 = vst [vmem:[#allocation3 + $0x20] sm:$0xff] %v933
    %947 = vst [vmem:[#allocation3 + $0x28] sm:$0xff] %v935
    %948 = vst [vmem:[#allocation3 + $0x30] sm:$0xff] %v938
    %949 = vst [vmem:[#allocation3 + $0x38] sm:$0xff] %v940
    %v950 = vld [vmem:[%s8] sm:$0xf]
    %v951 = vld [vmem:[%s8 + $0x4] sm:$0xf]
    %v952 = vld [vmem:[%s8 + $0x8] sm:$0xf]
    %v953 = vld [vmem:[%s8 + $0xc] sm:$0xf]
    %v954 = vld [vmem:[%s10] sm:$0x1]
    %s955 = scalar_lea.vmem %s1, 8
    %v956 = vld [vmem:[%s955] sm:$0xff]
    %v957 = vld [vmem:[#allocation3] sm:$0xff]
    %v958 = vpack.c.bf16 %v956, %v956
    %v960 = vperm.slane %v954, 0
    %v966 = vunpack.c.l.b16 %v950
    %v967 = vunpack.c.l.b16 %v951
    %v968 = vunpack.c.l.b16 %v952
    %v969 = vunpack.c.l.b16 %v953
    %v970 = vpack.c.b16 %v967, %v966
    %v971 = vpack.c.b16 %v969, %v968
    %v975 = vsel %vm143, %v958, 0
    %977 = vmatpush.bf16.msra.mxu0 0
    %978 = vmatpush.bf16.msra.mxu0 0
    %979 = vmatpush.bf16.msra.mxu0 0
    %980 = vmatpush.bf16.msra.mxu0 0
    %981 = vmatpush.bf16.msra.mxu0 0
    %982 = vmatpush.bf16.msra.mxu0 0
    %983 = vmatpush.bf16.msra.mxu0 %v971
    %984 = vmatpush.bf16.msra.mxu0 %v970
    %985 = vmatmul.bf16.gmra.mxu0 %v975
    %v986 = vpop.f32.mrf.mxu0
    %v987 = vadd.f32 %v960, %v986
    %v988 = vpop.f32.mrf.mxu0
    %989 = vdwg.mxu0
    %v990 = vadd.f32 %v957, %v987
    %v991 = vxor.u32 %v990, 2147483648
    %v992 = vmul.f32 %v991, 1.442695
    %v993 = vpow.pop %v992
    %v994 = vadd.f32 %v993, 1.0
    %v995 = vrcp.pop %v994
    %v996 = vmul.f32 %v994, %v995
    %v997 = vsub.f32 1.0, %v996
    %v998 = vmul.f32 %v995, %v997
    %v999 = vadd.f32 %v995, %v998
    %vm1000 = vweird.f32 %v994
    %vm1001 = vweird.f32 %v995
    %vm1002 = vmor %vm1000, %vm1001
    %v1003 = vsel %vm1002, %v995, %v999
    %v1004 = vand.u32 2147483647, %v994
    %vm1005 = vcmp.eq.f32.partialorder %v1004, 8.507059e+37
    %v1006 = vand.u32 %v994, 2147483648
    %v1007 = vor.u32 1.1754944e-38, %v1006
    %v1008 = vsel %vm1005, %v1007, %v1003
    %v1009 = vmul.f32 1.0, %v1008
    %1011 = vrot.lane.b32.xlu0 %v987, 64
    %v1012 = vpop.permute.xlu0 %1011
    %v1014 = vmul.f32 %v1009, %v1012
    %1016 = vrot.lane.b32.xlu0 %v1014, 64
    %v1017 = vpop.permute.xlu0 %1016
    %v1019 = vadd.f32 %v957, %v1017
    %v1020 = vtanh.pop %v1019
    %1022 = vrot.lane.b32.xlu0 %v1020, 64
    %v1023 = vpop.permute.xlu0 %1022
    %v1025 = vsub.f32 %v956, %v1023
    %1027 = vrot.lane.b32.xlu0 %v1025, 32
    %v1028 = vpop.permute.xlu0 %1027
    %v1030 = vmul.f32 %v1009, %v1028
    %1032 = vrot.lane.b32.xlu0 %v1030, 32
    %v1033 = vpop.permute.xlu0 %1032
    %v1035 = vadd.f32 %v1020, %v1033
    %v1036 = vmul.f32 %v212, %v1035
    %1038 = vrot.lane.b32.xlu0 %v1036, 64
    %v1039 = vpop.permute.xlu0 %1038
    %1041 = vst.msk [vmem:[#allocation2] sm:$0xff] %vm143, %v1039
    %1043 = vrot.lane.b32.xlu0 %v956, 64
    %v1044 = vpop.permute.xlu0 %1043
    %v1046 = vsub.f32 %v1035, %v1044
    %v1047 = vmul.f32 %v212, %v1046
    %1049 = vrot.lane.b32.xlu0 %v1047, 64
    %v1050 = vpop.permute.xlu0 %1049
    %v1052 = vadd.f32 %v956, %v1050
    %v1053 = vld [vmem:[%s231] sm:$0xff]
    %v1054 = vpack.c.bf16 %v1052, %v1052
    %v1056 = vsel %vm143, %v1054, 0
    %1058 = vmatpush.bf16.msra.mxu0 0
    %1059 = vmatpush.bf16.msra.mxu0 0
    %1060 = vmatpush.bf16.msra.mxu0 0
    %1061 = vmatpush.bf16.msra.mxu0 0
    %1062 = vmatpush.bf16.msra.mxu0 0
    %1063 = vmatpush.bf16.msra.mxu0 0
    %1064 = vmatpush.bf16.msra.mxu0 %v971
    %1065 = vmatpush.bf16.msra.mxu0 %v970
    %1066 = vmatmul.bf16.gmra.mxu0 %v1056
    %v1067 = vpop.f32.mrf.mxu0
    %v1068 = vadd.f32 %v960, %v1067
    %v1069 = vpop.f32.mrf.mxu0
    %1070 = vdwg.mxu0
    %v1071 = vadd.f32 %v1053, %v1068
    %v1072 = vxor.u32 %v1071, 2147483648
    %v1073 = vmul.f32 %v1072, 1.442695
    %v1074 = vpow.pop %v1073
    %v1075 = vadd.f32 %v1074, 1.0
    %v1076 = vrcp.pop %v1075
    %v1077 = vmul.f32 %v1075, %v1076
    %v1078 = vsub.f32 1.0, %v1077
    %v1079 = vmul.f32 %v1076, %v1078
    %v1080 = vadd.f32 %v1076, %v1079
    %vm1081 = vweird.f32 %v1075
    %vm1082 = vweird.f32 %v1076
    %vm1083 = vmor %vm1081, %vm1082
    %v1084 = vsel %vm1083, %v1076, %v1080
    %v1085 = vand.u32 2147483647, %v1075
    %vm1086 = vcmp.eq.f32.partialorder %v1085, 8.507059e+37
    %v1087 = vand.u32 %v1075, 2147483648
    %v1088 = vor.u32 1.1754944e-38, %v1087
    %v1089 = vsel %vm1086, %v1088, %v1084
    %v1090 = vmul.f32 1.0, %v1089
    %1092 = vrot.lane.b32.xlu0 %v1068, 64
    %v1093 = vpop.permute.xlu0 %1092
    %v1095 = vmul.f32 %v1090, %v1093
    %1097 = vrot.lane.b32.xlu0 %v1095, 64
    %v1098 = vpop.permute.xlu0 %1097
    %v1100 = vadd.f32 %v1053, %v1098
    %v1101 = vtanh.pop %v1100
    %1103 = vrot.lane.b32.xlu0 %v1101, 64
    %v1104 = vpop.permute.xlu0 %1103
    %v1106 = vsub.f32 %v1052, %v1104
    %1108 = vrot.lane.b32.xlu0 %v1106, 32
    %v1109 = vpop.permute.xlu0 %1108
    %v1111 = vmul.f32 %v1090, %v1109
    %1113 = vrot.lane.b32.xlu0 %v1111, 32
    %v1114 = vpop.permute.xlu0 %1113
    %v1116 = vadd.f32 %v1101, %v1114
    %v1117 = vmul.f32 %v302, %v1116
    %1119 = vrot.lane.b32.xlu0 %v1117, 64
    %v1120 = vpop.permute.xlu0 %1119
    %1122 = vst.msk [vmem:[%s309] sm:$0xff] %vm143, %v1120
    %1124 = vrot.lane.b32.xlu0 %v1052, 64
    %v1125 = vpop.permute.xlu0 %1124
    %v1127 = vsub.f32 %v1116, %v1125
    %v1128 = vmul.f32 %v302, %v1127
    %1130 = vrot.lane.b32.xlu0 %v1128, 64
    %v1131 = vpop.permute.xlu0 %1130
    %v1133 = vadd.f32 %v1052, %v1131
    %v1134 = vld [vmem:[%s322] sm:$0xff]
    %v1135 = vpack.c.bf16 %v1133, %v1133
    %v1137 = vsel %vm143, %v1135, 0
    %1139 = vmatpush.bf16.msra.mxu0 0
    %1140 = vmatpush.bf16.msra.mxu0 0
    %1141 = vmatpush.bf16.msra.mxu0 0
    %1142 = vmatpush.bf16.msra.mxu0 0
    %1143 = vmatpush.bf16.msra.mxu0 0
    %1144 = vmatpush.bf16.msra.mxu0 0
    %1145 = vmatpush.bf16.msra.mxu0 %v971
    %1146 = vmatpush.bf16.msra.mxu0 %v970
    %1147 = vmatmul.bf16.gmra.mxu0 %v1137
    %v1148 = vpop.f32.mrf.mxu0
    %v1149 = vadd.f32 %v960, %v1148
    %v1150 = vpop.f32.mrf.mxu0
    %1151 = vdwg.mxu0
    %v1152 = vadd.f32 %v1134, %v1149
    %v1153 = vxor.u32 %v1152, 2147483648
    %v1154 = vmul.f32 %v1153, 1.442695
    %v1155 = vpow.pop %v1154
    %v1156 = vadd.f32 %v1155, 1.0
    %v1157 = vrcp.pop %v1156
    %v1158 = vmul.f32 %v1156, %v1157
    %v1159 = vsub.f32 1.0, %v1158
    %v1160 = vmul.f32 %v1157, %v1159
    %v1161 = vadd.f32 %v1157, %v1160
    %vm1162 = vweird.f32 %v1156
    %vm1163 = vweird.f32 %v1157
    %vm1164 = vmor %vm1162, %vm1163
    %v1165 = vsel %vm1164, %v1157, %v1161
    %v1166 = vand.u32 2147483647, %v1156
    %vm1167 = vcmp.eq.f32.partialorder %v1166, 8.507059e+37
    %v1168 = vand.u32 %v1156, 2147483648
    %v1169 = vor.u32 1.1754944e-38, %v1168
    %v1170 = vsel %vm1167, %v1169, %v1165
    %v1171 = vmul.f32 1.0, %v1170
    %1173 = vrot.lane.b32.xlu0 %v1149, 64
    %v1174 = vpop.permute.xlu0 %1173
    %v1176 = vmul.f32 %v1171, %v1174
    %1178 = vrot.lane.b32.xlu0 %v1176, 64
    %v1179 = vpop.permute.xlu0 %1178
    %v1181 = vadd.f32 %v1134, %v1179
    %v1182 = vtanh.pop %v1181
    %1184 = vrot.lane.b32.xlu0 %v1182, 64
    %v1185 = vpop.permute.xlu0 %1184
    %v1187 = vsub.f32 %v1133, %v1185
    %1189 = vrot.lane.b32.xlu0 %v1187, 32
    %v1190 = vpop.permute.xlu0 %1189
    %v1192 = vmul.f32 %v1171, %v1190
    %1194 = vrot.lane.b32.xlu0 %v1192, 32
    %v1195 = vpop.permute.xlu0 %1194
    %v1197 = vadd.f32 %v1182, %v1195
    %v1198 = vmul.f32 %v393, %v1197
    %1200 = vrot.lane.b32.xlu0 %v1198, 64
    %v1201 = vpop.permute.xlu0 %1200
    %1203 = vst.msk [vmem:[%s400] sm:$0xff] %vm143, %v1201
    %1205 = vrot.lane.b32.xlu0 %v1133, 64
    %v1206 = vpop.permute.xlu0 %1205
    %v1208 = vsub.f32 %v1197, %v1206
    %v1209 = vmul.f32 %v393, %v1208
    %1211 = vrot.lane.b32.xlu0 %v1209, 64
    %v1212 = vpop.permute.xlu0 %1211
    %v1214 = vadd.f32 %v1133, %v1212
    %v1215 = vld [vmem:[%s413] sm:$0xff]
    %v1216 = vpack.c.bf16 %v1214, %v1214
    %v1218 = vsel %vm143, %v1216, 0
    %1220 = vmatpush.bf16.msra.mxu0 0
    %1221 = vmatpush.bf16.msra.mxu0 0
    %1222 = vmatpush.bf16.msra.mxu0 0
    %1223 = vmatpush.bf16.msra.mxu0 0
    %1224 = vmatpush.bf16.msra.mxu0 0
    %1225 = vmatpush.bf16.msra.mxu0 0
    %1226 = vmatpush.bf16.msra.mxu0 %v971
    %1227 = vmatpush.bf16.msra.mxu0 %v970
    %1228 = vmatmul.bf16.gmra.mxu0 %v1218
    %v1229 = vpop.f32.mrf.mxu0
    %v1230 = vadd.f32 %v960, %v1229
    %v1231 = vpop.f32.mrf.mxu0
    %1232 = vdwg.mxu0
    %v1233 = vadd.f32 %v1215, %v1230
    %v1234 = vxor.u32 %v1233, 2147483648
    %v1235 = vmul.f32 %v1234, 1.442695
    %v1236 = vpow.pop %v1235
    %v1237 = vadd.f32 %v1236, 1.0
    %v1238 = vrcp.pop %v1237
    %v1239 = vmul.f32 %v1237, %v1238
    %v1240 = vsub.f32 1.0, %v1239
    %v1241 = vmul.f32 %v1238, %v1240
    %v1242 = vadd.f32 %v1238, %v1241
    %vm1243 = vweird.f32 %v1237
    %vm1244 = vweird.f32 %v1238
    %vm1245 = vmor %vm1243, %vm1244
    %v1246 = vsel %vm1245, %v1238, %v1242
    %v1247 = vand.u32 2147483647, %v1237
    %vm1248 = vcmp.eq.f32.partialorder %v1247, 8.507059e+37
    %v1249 = vand.u32 %v1237, 2147483648
    %v1250 = vor.u32 1.1754944e-38, %v1249
    %v1251 = vsel %vm1248, %v1250, %v1246
    %v1252 = vmul.f32 1.0, %v1251
    %1254 = vrot.lane.b32.xlu0 %v1230, 64
    %v1255 = vpop.permute.xlu0 %1254
    %v1257 = vmul.f32 %v1252, %v1255
    %1259 = vrot.lane.b32.xlu0 %v1257, 64
    %v1260 = vpop.permute.xlu0 %1259
    %v1262 = vadd.f32 %v1215, %v1260
    %v1263 = vtanh.pop %v1262
    %1265 = vrot.lane.b32.xlu0 %v1263, 64
    %v1266 = vpop.permute.xlu0 %1265
    %v1268 = vsub.f32 %v1214, %v1266
    %1270 = vrot.lane.b32.xlu0 %v1268, 32
    %v1271 = vpop.permute.xlu0 %1270
    %v1273 = vmul.f32 %v1252, %v1271
    %1275 = vrot.lane.b32.xlu0 %v1273, 32
    %v1276 = vpop.permute.xlu0 %1275
    %v1278 = vadd.f32 %v1263, %v1276
    %v1279 = vmul.f32 %v484, %v1278
    %1281 = vrot.lane.b32.xlu0 %v1279, 64
    %v1282 = vpop.permute.xlu0 %1281
    %1284 = vst.msk [vmem:[%s491] sm:$0xff] %vm143, %v1282
    %1286 = vrot.lane.b32.xlu0 %v1214, 64
    %v1287 = vpop.permute.xlu0 %1286
    %v1289 = vsub.f32 %v1278, %v1287
    %v1290 = vmul.f32 %v484, %v1289
    %1292 = vrot.lane.b32.xlu0 %v1290, 64
    %v1293 = vpop.permute.xlu0 %1292
    %v1295 = vadd.f32 %v1214, %v1293
    %v1296 = vld [vmem:[%s504] sm:$0xff]
    %v1297 = vpack.c.bf16 %v1295, %v1295
    %v1299 = vsel %vm143, %v1297, 0
    %1301 = vmatpush.bf16.msra.mxu0 0
    %1302 = vmatpush.bf16.msra.mxu0 0
    %1303 = vmatpush.bf16.msra.mxu0 0
    %1304 = vmatpush.bf16.msra.mxu0 0
    %1305 = vmatpush.bf16.msra.mxu0 0
    %1306 = vmatpush.bf16.msra.mxu0 0
    %1307 = vmatpush.bf16.msra.mxu0 %v971
    %1308 = vmatpush.bf16.msra.mxu0 %v970
    %1309 = vmatmul.bf16.gmra.mxu0 %v1299
    %v1310 = vpop.f32.mrf.mxu0
    %v1311 = vadd.f32 %v960, %v1310
    %v1312 = vpop.f32.mrf.mxu0
    %1313 = vdwg.mxu0
    %v1314 = vadd.f32 %v1296, %v1311
    %v1315 = vxor.u32 %v1314, 2147483648
    %v1316 = vmul.f32 %v1315, 1.442695
    %v1317 = vpow.pop %v1316
    %v1318 = vadd.f32 %v1317, 1.0
    %v1319 = vrcp.pop %v1318
    %v1320 = vmul.f32 %v1318, %v1319
    %v1321 = vsub.f32 1.0, %v1320
    %v1322 = vmul.f32 %v1319, %v1321
    %v1323 = vadd.f32 %v1319, %v1322
    %vm1324 = vweird.f32 %v1318
    %vm1325 = vweird.f32 %v1319
    %vm1326 = vmor %vm1324, %vm1325
    %v1327 = vsel %vm1326, %v1319, %v1323
    %v1328 = vand.u32 2147483647, %v1318
    %vm1329 = vcmp.eq.f32.partialorder %v1328, 8.507059e+37
    %v1330 = vand.u32 %v1318, 2147483648
    %v1331 = vor.u32 1.1754944e-38, %v1330
    %v1332 = vsel %vm1329, %v1331, %v1327
    %v1333 = vmul.f32 1.0, %v1332
    %1335 = vrot.lane.b32.xlu0 %v1311, 64
    %v1336 = vpop.permute.xlu0 %1335
    %v1338 = vmul.f32 %v1333, %v1336
    %1340 = vrot.lane.b32.xlu0 %v1338, 64
    %v1341 = vpop.permute.xlu0 %1340
    %v1343 = vadd.f32 %v1296, %v1341
    %v1344 = vtanh.pop %v1343
    %1346 = vrot.lane.b32.xlu0 %v1344, 64
    %v1347 = vpop.permute.xlu0 %1346
    %v1349 = vsub.f32 %v1295, %v1347
    %1351 = vrot.lane.b32.xlu0 %v1349, 32
    %v1352 = vpop.permute.xlu0 %1351
    %v1354 = vmul.f32 %v1333, %v1352
    %1356 = vrot.lane.b32.xlu0 %v1354, 32
    %v1357 = vpop.permute.xlu0 %1356
    %v1359 = vadd.f32 %v1344, %v1357
    %v1360 = vmul.f32 %v575, %v1359
    %1362 = vrot.lane.b32.xlu0 %v1360, 64
    %v1363 = vpop.permute.xlu0 %1362
    %1365 = vst.msk [vmem:[%s582] sm:$0xff] %vm143, %v1363
    %1367 = vrot.lane.b32.xlu0 %v1295, 64
    %v1368 = vpop.permute.xlu0 %1367
    %v1370 = vsub.f32 %v1359, %v1368
    %v1371 = vmul.f32 %v575, %v1370
    %1373 = vrot.lane.b32.xlu0 %v1371, 64
    %v1374 = vpop.permute.xlu0 %1373
    %v1376 = vadd.f32 %v1295, %v1374
    %v1377 = vld [vmem:[%s595] sm:$0xff]
    %v1378 = vpack.c.bf16 %v1376, %v1376
    %v1380 = vsel %vm143, %v1378, 0
    %1382 = vmatpush.bf16.msra.mxu0 0
    %1383 = vmatpush.bf16.msra.mxu0 0
    %1384 = vmatpush.bf16.msra.mxu0 0
    %1385 = vmatpush.bf16.msra.mxu0 0
    %1386 = vmatpush.bf16.msra.mxu0 0
    %1387 = vmatpush.bf16.msra.mxu0 0
    %1388 = vmatpush.bf16.msra.mxu0 %v971
    %1389 = vmatpush.bf16.msra.mxu0 %v970
    %1390 = vmatmul.bf16.gmra.mxu0 %v1380
    %v1391 = vpop.f32.mrf.mxu0
    %v1392 = vadd.f32 %v960, %v1391
    %v1393 = vpop.f32.mrf.mxu0
    %1394 = vdwg.mxu0
    %v1395 = vadd.f32 %v1377, %v1392
    %v1396 = vxor.u32 %v1395, 2147483648
    %v1397 = vmul.f32 %v1396, 1.442695
    %v1398 = vpow.pop %v1397
    %v1399 = vadd.f32 %v1398, 1.0
    %v1400 = vrcp.pop %v1399
    %v1401 = vmul.f32 %v1399, %v1400
    %v1402 = vsub.f32 1.0, %v1401
    %v1403 = vmul.f32 %v1400, %v1402
    %v1404 = vadd.f32 %v1400, %v1403
    %vm1405 = vweird.f32 %v1399
    %vm1406 = vweird.f32 %v1400
    %vm1407 = vmor %vm1405, %vm1406
    %v1408 = vsel %vm1407, %v1400, %v1404
    %v1409 = vand.u32 2147483647, %v1399
    %vm1410 = vcmp.eq.f32.partialorder %v1409, 8.507059e+37
    %v1411 = vand.u32 %v1399, 2147483648
    %v1412 = vor.u32 1.1754944e-38, %v1411
    %v1413 = vsel %vm1410, %v1412, %v1408
    %v1414 = vmul.f32 1.0, %v1413
    %1416 = vrot.lane.b32.xlu0 %v1392, 64
    %v1417 = vpop.permute.xlu0 %1416
    %v1419 = vmul.f32 %v1414, %v1417
    %1421 = vrot.lane.b32.xlu0 %v1419, 64
    %v1422 = vpop.permute.xlu0 %1421
    %v1424 = vadd.f32 %v1377, %v1422
    %v1425 = vtanh.pop %v1424
    %1427 = vrot.lane.b32.xlu0 %v1425, 64
    %v1428 = vpop.permute.xlu0 %1427
    %v1430 = vsub.f32 %v1376, %v1428
    %1432 = vrot.lane.b32.xlu0 %v1430, 32
    %v1433 = vpop.permute.xlu0 %1432
    %v1435 = vmul.f32 %v1414, %v1433
    %1437 = vrot.lane.b32.xlu0 %v1435, 32
    %v1438 = vpop.permute.xlu0 %1437
    %v1440 = vadd.f32 %v1425, %v1438
    %v1441 = vmul.f32 %v666, %v1440
    %1443 = vrot.lane.b32.xlu0 %v1441, 64
    %v1444 = vpop.permute.xlu0 %1443
    %1446 = vst.msk [vmem:[%s673] sm:$0xff] %vm143, %v1444
    %1448 = vrot.lane.b32.xlu0 %v1376, 64
    %v1449 = vpop.permute.xlu0 %1448
    %v1451 = vsub.f32 %v1440, %v1449
    %v1452 = vmul.f32 %v666, %v1451
    %1454 = vrot.lane.b32.xlu0 %v1452, 64
    %v1455 = vpop.permute.xlu0 %1454
    %v1457 = vadd.f32 %v1376, %v1455
    %v1458 = vld [vmem:[%s686] sm:$0xff]
    %v1459 = vpack.c.bf16 %v1457, %v1457
    %v1461 = vsel %vm143, %v1459, 0
    %1463 = vmatpush.bf16.msra.mxu0 0
    %1464 = vmatpush.bf16.msra.mxu0 0
    %1465 = vmatpush.bf16.msra.mxu0 0
    %1466 = vmatpush.bf16.msra.mxu0 0
    %1467 = vmatpush.bf16.msra.mxu0 0
    %1468 = vmatpush.bf16.msra.mxu0 0
    %1469 = vmatpush.bf16.msra.mxu0 %v971
    %1470 = vmatpush.bf16.msra.mxu0 %v970
    %1471 = vmatmul.bf16.gmra.mxu0 %v1461
    %v1472 = vpop.f32.mrf.mxu0
    %v1473 = vadd.f32 %v960, %v1472
    %v1474 = vpop.f32.mrf.mxu0
    %1475 = vdwg.mxu0
    %v1476 = vadd.f32 %v1458, %v1473
    %v1477 = vxor.u32 %v1476, 2147483648
    %v1478 = vmul.f32 %v1477, 1.442695
    %v1479 = vpow.pop %v1478
    %v1480 = vadd.f32 %v1479, 1.0
    %v1481 = vrcp.pop %v1480
    %v1482 = vmul.f32 %v1480, %v1481
    %v1483 = vsub.f32 1.0, %v1482
    %v1484 = vmul.f32 %v1481, %v1483
    %v1485 = vadd.f32 %v1481, %v1484
    %vm1486 = vweird.f32 %v1480
    %vm1487 = vweird.f32 %v1481
    %vm1488 = vmor %vm1486, %vm1487
    %v1489 = vsel %vm1488, %v1481, %v1485
    %v1490 = vand.u32 2147483647, %v1480
    %vm1491 = vcmp.eq.f32.partialorder %v1490, 8.507059e+37
    %v1492 = vand.u32 %v1480, 2147483648
    %v1493 = vor.u32 1.1754944e-38, %v1492
    %v1494 = vsel %vm1491, %v1493, %v1489
    %v1495 = vmul.f32 1.0, %v1494
    %1497 = vrot.lane.b32.xlu0 %v1473, 64
    %v1498 = vpop.permute.xlu0 %1497
    %v1500 = vmul.f32 %v1495, %v1498
    %1502 = vrot.lane.b32.xlu0 %v1500, 64
    %v1503 = vpop.permute.xlu0 %1502
    %v1505 = vadd.f32 %v1458, %v1503
    %v1506 = vtanh.pop %v1505
    %1508 = vrot.lane.b32.xlu0 %v1506, 64
    %v1509 = vpop.permute.xlu0 %1508
    %v1511 = vsub.f32 %v1457, %v1509
    %1513 = vrot.lane.b32.xlu0 %v1511, 32
    %v1514 = vpop.permute.xlu0 %1513
    %v1516 = vmul.f32 %v1495, %v1514
    %1518 = vrot.lane.b32.xlu0 %v1516, 32
    %v1519 = vpop.permute.xlu0 %1518
    %v1521 = vadd.f32 %v1506, %v1519
    %v1522 = vmul.f32 %v757, %v1521
    %1524 = vrot.lane.b32.xlu0 %v1522, 64
    %v1525 = vpop.permute.xlu0 %1524
    %1527 = vst.msk [vmem:[%s764] sm:$0xff] %vm143, %v1525
    %1529 = vrot.lane.b32.xlu0 %v1457, 64
    %v1530 = vpop.permute.xlu0 %1529
    %v1532 = vsub.f32 %v1521, %v1530
    %v1533 = vmul.f32 %v757, %v1532
    %1535 = vrot.lane.b32.xlu0 %v1533, 64
    %v1536 = vpop.permute.xlu0 %1535
    %v1538 = vadd.f32 %v1457, %v1536
    %v1539 = vld [vmem:[%s777] sm:$0xff]
    %v1540 = vpack.c.bf16 %v1538, %v1538
    %v1542 = vsel %vm143, %v1540, 0
    %1544 = vmatpush.bf16.msra.mxu0 0
    %1545 = vmatpush.bf16.msra.mxu0 0
    %1546 = vmatpush.bf16.msra.mxu0 0
    %1547 = vmatpush.bf16.msra.mxu0 0
    %1548 = vmatpush.bf16.msra.mxu0 0
    %1549 = vmatpush.bf16.msra.mxu0 0
    %1550 = vmatpush.bf16.msra.mxu0 %v971
    %1551 = vmatpush.bf16.msra.mxu0 %v970
    %1552 = vmatmul.bf16.gmra.mxu0 %v1542
    %v1553 = vpop.f32.mrf.mxu0
    %v1554 = vadd.f32 %v960, %v1553
    %v1555 = vpop.f32.mrf.mxu0
    %1556 = vdwg.mxu0
    %v1557 = vadd.f32 %v1539, %v1554
    %v1558 = vxor.u32 %v1557, 2147483648
    %v1559 = vmul.f32 %v1558, 1.442695
    %v1560 = vpow.pop %v1559
    %v1561 = vadd.f32 %v1560, 1.0
    %v1562 = vrcp.pop %v1561
    %v1563 = vmul.f32 %v1561, %v1562
    %v1564 = vsub.f32 1.0, %v1563
    %v1565 = vmul.f32 %v1562, %v1564
    %v1566 = vadd.f32 %v1562, %v1565
    %vm1567 = vweird.f32 %v1561
    %vm1568 = vweird.f32 %v1562
    %vm1569 = vmor %vm1567, %vm1568
    %v1570 = vsel %vm1569, %v1562, %v1566
    %v1571 = vand.u32 2147483647, %v1561
    %vm1572 = vcmp.eq.f32.partialorder %v1571, 8.507059e+37
    %v1573 = vand.u32 %v1561, 2147483648
    %v1574 = vor.u32 1.1754944e-38, %v1573
    %v1575 = vsel %vm1572, %v1574, %v1570
    %v1576 = vmul.f32 1.0, %v1575
    %1578 = vrot.lane.b32.xlu0 %v1554, 64
    %v1579 = vpop.permute.xlu0 %1578
    %v1581 = vmul.f32 %v1576, %v1579
    %1583 = vrot.lane.b32.xlu0 %v1581, 64
    %v1584 = vpop.permute.xlu0 %1583
    %v1586 = vadd.f32 %v1539, %v1584
    %v1587 = vtanh.pop %v1586
    %1589 = vrot.lane.b32.xlu0 %v1587, 64
    %v1590 = vpop.permute.xlu0 %1589
    %v1592 = vsub.f32 %v1538, %v1590
    %1594 = vrot.lane.b32.xlu0 %v1592, 32
    %v1595 = vpop.permute.xlu0 %1594
    %v1597 = vmul.f32 %v1576, %v1595
    %1599 = vrot.lane.b32.xlu0 %v1597, 32
    %v1600 = vpop.permute.xlu0 %1599
    %v1602 = vadd.f32 %v1587, %v1600
    %v1603 = vmul.f32 %v848, %v1602
    %1605 = vrot.lane.b32.xlu0 %v1603, 64
    %v1606 = vpop.permute.xlu0 %1605
    %1608 = vst.msk [vmem:[%s855] sm:$0xff] %vm143, %v1606
    %1610 = vrot.lane.b32.xlu0 %v1538, 64
    %v1611 = vpop.permute.xlu0 %1610
    %v1613 = vsub.f32 %v1602, %v1611
    %v1614 = vmul.f32 %v848, %v1613
    %1616 = vrot.lane.b32.xlu0 %v1614, 64
    %v1617 = vpop.permute.xlu0 %1616
    %v1619 = vadd.f32 %v1538, %v1617
    %s1620 = scalar_lea.vmem [#allocation4], 8
    %1621 = vst.msk [vmem:[%s1620] sm:$0xff] %vm143, %v1619
    %v1622 = vld [vmem:[#allocation2] sm:$0xff]
    %v1623 = vld [vmem:[#allocation2 + $0x8] sm:$0xff]
    %v1624 = vld [vmem:[#allocation2 + $0x10] sm:$0xff]
    %v1625 = vld [vmem:[#allocation2 + $0x18] sm:$0xff]
    %v1626 = vld [vmem:[#allocation2 + $0x20] sm:$0xff]
    %v1627 = vld [vmem:[#allocation2 + $0x28] sm:$0xff]
    %v1628 = vld [vmem:[#allocation2 + $0x30] sm:$0xff]
    %v1629 = vld [vmem:[#allocation2 + $0x38] sm:$0xff]
    %v1630 = vpack.c.bf16 %v1623, %v1622
    %v1631 = vpack.c.bf16 %v1625, %v1624
    %v1632 = vpack.c.bf16 %v1627, %v1626
    %v1633 = vpack.c.bf16 %v1629, %v1628
    %v1634 = vld [vmem:[%s11] sm:$0xf]
    %v1635 = vld [vmem:[%s11 + $0x4] sm:$0xf]
    %v1636 = vld [vmem:[%s11 + $0x8] sm:$0xf]
    %v1637 = vld [vmem:[%s11 + $0xc] sm:$0xf]
    %v1638 = vld [vmem:[%s12] sm:$0x1]
    %v1640 = vperm.slane %v1638, 0
    %v1646 = vunpack.c.l.b16 %v1634
    %v1647 = vunpack.c.l.b16 %v1635
    %v1648 = vunpack.c.l.b16 %v1636
    %v1649 = vunpack.c.l.b16 %v1637
    %v1650 = vpack.c.b16 %v1647, %v1646
    %v1651 = vpack.c.b16 %v1649, %v1648
    %v1655 = vsel %vm143, %v1630, 0
    %v1658 = vsel %vm143, %v1631, 0
    %v1661 = vsel %vm143, %v1632, 0
    %v1664 = vsel %vm143, %v1633, 0
    %1666 = vmatpush.bf16.msra.mxu0 0
    %1667 = vmatpush.bf16.msra.mxu0 0
    %1668 = vmatpush.bf16.msra.mxu0 0
    %1669 = vmatpush.bf16.msra.mxu0 0
    %1670 = vmatpush.bf16.msra.mxu0 0
    %1671 = vmatpush.bf16.msra.mxu0 0
    %1672 = vmatpush.bf16.msra.mxu0 %v1651
    %1673 = vmatpush.bf16.msra.mxu0 %v1650
    %1674 = vmatmul.bf16.gmra.mxu0 %v1655
    %v1675 = vpop.f32.mrf.mxu0
    %v1676 = vadd.f32 %v1640, %v1675
    %v1677 = vpop.f32.mrf.mxu0
    %v1678 = vadd.f32 %v1640, %v1677
    %1679 = vmatmul.bf16.gmra.mxu0 %v1658
    %v1680 = vpop.f32.mrf.mxu0
    %v1681 = vadd.f32 %v1640, %v1680
    %v1682 = vpop.f32.mrf.mxu0
    %v1683 = vadd.f32 %v1640, %v1682
    %1684 = vmatmul.bf16.gmra.mxu0 %v1661
    %v1685 = vpop.f32.mrf.mxu0
    %v1686 = vadd.f32 %v1640, %v1685
    %v1687 = vpop.f32.mrf.mxu0
    %v1688 = vadd.f32 %v1640, %v1687
    %1689 = vmatmul.bf16.gmra.mxu0 %v1664
    %v1690 = vpop.f32.mrf.mxu0
    %v1691 = vadd.f32 %v1640, %v1690
    %v1692 = vpop.f32.mrf.mxu0
    %v1693 = vadd.f32 %v1640, %v1692
    %1694 = vdwg.mxu0
    %vm1695 = vcmask 130048
    %1696 = vst.msk [vmem:[%s13] sm:$0xff] %vm1695, %v1676
    %1697 = vst.msk [vmem:[%s13 + $0x8] sm:$0xff] %vm1695, %v1678
    %1698 = vst.msk [vmem:[%s13 + $0x10] sm:$0xff] %vm1695, %v1681
    %1699 = vst.msk [vmem:[%s13 + $0x18] sm:$0xff] %vm1695, %v1683
    %1700 = vst.msk [vmem:[%s13 + $0x20] sm:$0xff] %vm1695, %v1686
    %1701 = vst.msk [vmem:[%s13 + $0x28] sm:$0xff] %vm1695, %v1688
    %1702 = vst.msk [vmem:[%s13 + $0x30] sm:$0xff] %vm1695, %v1691
    %1703 = vst.msk [vmem:[%s13 + $0x38] sm:$0xff] %vm1695, %v1693
    // Predicated region
    $region54: #{tpu_custom_call.1} parent=1 // pred_check
      _
    $region55: #{tpu_custom_call.1} parent=1 // pred_check_branch
      %1705 = sbr.rel (0) target = $region57
    $region56: #{tpu_custom_call.1} parent=1 // pred_region
      _
    $region57: #{tpu_custom_call.1} parent=1 // pred_fallthru
      _
    // Predicated region
    $region58: #{tpu_custom_call.1} parent=1 // pred_check
      _
    $region59: #{tpu_custom_call.1} parent=1 // pred_check_branch
      %1707 = sbr.rel (0) target = $region61
    $region60: #{tpu_custom_call.1} parent=1 // pred_region
      %1709 = vsyncadd [#allocation5], 0
      %s1710 = sshll.u32 [#allocation4], 4
      %s1711 = int_to_ptr.vmem [resolvable:$true] %s1710
      %s1712 = sshll.u32 %s14, 4
      %s1713 = int_to_ptr.hbm [resolvable:$true] %s1712
      %1718 = dma.vmem_to_hbm [thread:$0]  %s1711, 256, %s1713, [#allocation5], 128, 128, 8
    $region61: #{tpu_custom_call.1} parent=1 // pred_fallthru
      _
    // Predicated region
    $region62: #{tpu_custom_call.1} parent=1 // pred_check
      _
    $region63: #{tpu_custom_call.1} parent=1 // pred_check_branch
      %1720 = sbr.rel (0) target = $region65
    $region64: #{tpu_custom_call.1} parent=1 // pred_region
      _
    $region65: #{tpu_custom_call.1} parent=1 // pred_fallthru
      _
    // Predicated region
    $region66: #{tpu_custom_call.1} parent=1 // pred_check
      _
    $region67: #{tpu_custom_call.1} parent=1 // pred_check_branch
      %1722 = sbr.rel (0) target = $region69
    $region68: #{tpu_custom_call.1} parent=1 // pred_region
      %1724 = dma.done [#allocation5], 256
    $region69: #{tpu_custom_call.1} parent=1 // pred_fallthru
      _
    %1725 = vsyncpa [#allocation5], 1

</llo_original>
